<compile_context>
chip_gen: v7x
topology: tpu7x:2x2x1
jax: 0.10.0
libtpu: 0.0.40
codegen_flags: <defaults>
</compile_context>

<pallas_src>
import jax
import jax.numpy as jnp
from jax.experimental import pallas as pl
from jax.experimental.pallas import tpu as pltpu


def _conv_bn_relu_kernel(x_ref, w_ref, bias_ref, o_ref):
    # x_ref:    (1, 1, TH+2, W, K_pad)  bf16  one H tile incl. 2 halo rows; kw folded into K
    # w_ref:    (3, K_pad, TCO)         bf16  per-kh (K, N) weight tiles, BN scale pre-folded
    # bias_ref: (1, TCO)                f32   folded BN bias (beta - mean * scale)
    # o_ref:    (1, 1, TH*W, TCO)       f32   lane-dense output tile
    th = x_ref.shape[2] - 2
    wd = x_ref.shape[3]
    k = x_ref.shape[4]

    acc = None
    for kh in range(3):  # static unroll: 3 MXU pushes with K = K_pad, accumulate in registers
        # Leading-dim slice along the tile's H axis (free); K_pad is a multiple of 128 so the
        # (th, W, K) -> (th*W, K) reshape is a sublane merge, not a cross-lane relayout.
        lhs = x_ref[0, 0, kh:kh + th, :, :].reshape(th * wd, k)
        contrib = jnp.dot(lhs, w_ref[kh], preferred_element_type=jnp.float32)
        acc = contrib if acc is None else acc + contrib

    y = acc + bias_ref[...]                                  # eval-mode BN bias (f32)
    o_ref[0, 0] = jnp.maximum(y, 0.0).astype(o_ref.dtype)    # ReLU, full-lane store


def _vmem_budget_bytes():
    """Per-generation VMEM budget: ~38 MiB on v7x (64 MiB/TC), ~77-96 MiB on v5e/v6e (128 MiB)."""
    cap = 128 * 1024 * 1024
    try:
        info = pltpu.get_tpu_info()
        cap = int(getattr(info, "vmem_capacity_bytes", cap) or cap)
    except Exception:
        pass
    return min(int(cap * 0.6), 96 * 1024 * 1024)


def _pick_tile_h(h, w, k_pad, tco, out_bytes, budget, target_rows=2048):
    """Largest TH dividing H with TH*W <= target_rows whose working set fits the VMEM budget."""
    w_bytes = 2 * 3 * k_pad * tco * 2           # double-buffered bf16 weight block
    bias_bytes = 2 * tco * 4
    best = 1
    for th in range(1, h + 1):
        if h % th:
            continue
        tm = th * w
        if th > 1 and tm > target_rows:
            continue
        x_bytes = 2 * (th + 2) * w * k_pad * 2  # double-buffered bf16 input tile
        o_bytes = 2 * tm * tco * out_bytes      # double-buffered output tile
        live = tm * (k_pad * 2 + 2 * tco * 4)   # in-kernel lhs + f32 accumulator temporaries
        if th == 1 or (w_bytes + bias_bytes + x_bytes + o_bytes + live) <= budget:
            best = th
    return best


def single_conv_forward(x_nchw, weight, gamma, beta, running_mean, running_var,
                        eps=1e-5, out_dtype=jnp.float32):
    """Forward pass of SingleConv. x_nchw: (N, Cin, H, W); weight: (Cout, Cin, 3, 3)."""
    n, cin, h, w = x_nchw.shape
    cout = weight.shape[0]
    cout_pad = pl.cdiv(cout, 128) * 128
    tco = 256 if cout_pad % 256 == 0 else 128          # native MXU N width on v6e/v7x
    n_co = cout_pad // tco
    k = 3 * cin
    k_pad = pl.cdiv(k, 128) * 128                      # lane-aligned MXU K axis
    out_bytes = jnp.dtype(out_dtype).itemsize

    budget = _vmem_budget_bytes()
    th = _pick_tile_h(h, w, k_pad, tco, out_bytes, budget)
    n_h = h // th
    tm = th * w

    # Fold eval-mode BatchNorm: scale folded into the weights (f32, before quantization).
    # TODO(synk): PyTorch train-mode BN (batch statistics) is not modeled; eval-mode semantics.
    scale = (gamma / jnp.sqrt(running_var + eps)).astype(jnp.float32)
    bias = (beta - running_mean * scale).astype(jnp.float32)
    bias_p = jnp.pad(bias, (0, cout_pad - cout)).reshape(1, cout_pad)

    # Weights (Cout, Cin, 3, 3) * scale -> per-kh 2D MXU tiles (3, K_pad, Cout_pad), bf16.
    w_fold = weight.astype(jnp.float32) * scale[:, None, None, None]
    w_k = jnp.transpose(w_fold, (2, 3, 1, 0)).reshape(3, k, cout)
    w_k = jnp.pad(w_k, ((0, 0), (0, k_pad - k), (0, cout_pad - cout))).astype(jnp.bfloat16)

    # NCHW -> NHWC, cast to bf16 before padding/gathering so every pass moves half the bytes.
    # TODO(synk): NCHW<->NHWC transposes are extra HBM passes; NHWC-native I/O would remove them.
    x_nhwc = jnp.transpose(x_nchw.astype(jnp.bfloat16), (0, 2, 3, 1))
    x_pad = jnp.pad(x_nhwc, ((0, 0), (1, 1), (1, 1), (0, 0)))

    # Build overlapping H-row windows (2 halo rows per tile), fold the 3 kw taps into the K
    # axis, and zero-pad K to K_pad in ONE materialized tensor so XLA fuses gather + slice +
    # concat + pad into a single HBM pass: (N, n_h, TH+2, W, K_pad).
    # TODO(synk): an Element-indexed H dim in the x BlockSpec would avoid materializing the
    # overlapping windows entirely.
    row_idx = (jnp.arange(n_h, dtype=jnp.int32)[:, None] * th
               + jnp.arange(th + 2, dtype=jnp.int32)[None, :])
    x_win = x_pad[:, row_idx]                                      # (N, n_h, TH+2, W+2, Cin)
    x_kw = jnp.concatenate([x_win[..., kw:kw + w, :] for kw in range(3)], axis=-1)
    x_tiles = jnp.pad(x_kw, ((0, 0), (0, 0), (0, 0), (0, 0), (0, k_pad - k)))

    flops = 2 * 9 * n * h * w * cin * cout
    bytes_accessed = int(x_tiles.size * 2 + w_k.size * 2 + bias_p.size * 4
                         + n * n_h * tm * cout_pad * out_bytes)

    out = pl.pallas_call(
        _conv_bn_relu_kernel,
        out_shape=jax.ShapeDtypeStruct((n, n_h, tm, cout_pad), out_dtype),
        grid_spec=pltpu.PrefetchScalarGridSpec(
            num_scalar_prefetch=0,
            grid=(n, n_h, n_co),
            in_specs=[
                pl.BlockSpec((1, 1, th + 2, w, k_pad), lambda b, t, c: (b, t, 0, 0, 0)),
                pl.BlockSpec((3, k_pad, tco), lambda b, t, c: (0, 0, c)),
                pl.BlockSpec((1, tco), lambda b, t, c: (0, c)),
            ],
            out_specs=pl.BlockSpec((1, 1, tm, tco), lambda b, t, c: (b, t, 0, c)),
        ),
        compiler_params=pltpu.CompilerParams(
            dimension_semantics=("parallel", "parallel", "parallel"),
            vmem_limit_bytes=budget,
        ),
        cost_estimate=pl.CostEstimate(
            flops=flops, transcendentals=0, bytes_accessed=bytes_accessed),
    )(x_tiles, w_k, bias_p)

    # (N, n_h, TH*W, Cout_pad) -> (N, H, W, Cout) -> NCHW (PyTorch convention).
    # TODO(synk): returning NHWC with padded Cout (bf16) would skip this extra HBM pass.
    out = out.reshape(n, h, w, cout_pad)[..., :cout]
    return jnp.transpose(out, (0, 3, 1, 2)).astype(jnp.float32)


def _reference_forward(x_nchw, weight, gamma, beta, running_mean, running_var, eps=1e-5):
    """Plain-JAX reference (NCHW conv + eval BN + ReLU)."""
    y = jax.lax.conv_general_dilated(
        x_nchw.astype(jnp.float32), weight.astype(jnp.float32),
        window_strides=(1, 1), padding=((1, 1), (1, 1)),
        dimension_numbers=("NCHW", "OIHW", "NCHW"))
    scale = (gamma / jnp.sqrt(running_var + eps)).reshape(1, -1, 1, 1)
    bias = (beta - running_mean * gamma / jnp.sqrt(running_var + eps)).reshape(1, -1, 1, 1)
    return jnp.maximum(y * scale + bias, 0.0)


if __name__ == "__main__":
    key = jax.random.PRNGKey(0)
    N, Cin, Cout, H, W = 2, 4, 8, 16, 16

    k_x, k_w, k_g, k_b = jax.random.split(key, 4)
    x = jax.random.normal(k_x, (N, Cin, H, W), dtype=jnp.float32)
    # Conv2d weight (Cout, Cin, 3, 3); deterministic synthetic init.
    fan_in = Cin * 3 * 3
    bound = 1.0 / (fan_in ** 0.5)
    weight = jax.random.uniform(k_w, (Cout, Cin, 3, 3), jnp.float32, -bound, bound)
    # BatchNorm2d params; evaluated in eval mode with running stats.
    gamma = 1.0 + 0.1 * jax.random.normal(k_g, (Cout,), jnp.float32)
    beta = 0.1 * jax.random.normal(k_b, (Cout,), jnp.float32)
    running_mean = jnp.zeros((Cout,), jnp.float32)
    running_var = jnp.ones((Cout,), jnp.float32)

    out = single_conv_forward(x, weight, gamma, beta, running_mean, running_var)
    out = jax.block_until_ready(out)
    assert out.shape == (N, Cout, H, W)

    # Tight check: reference fed the SAME quantized operands the kernel sees
    # (bf16 activations, bf16 scale-folded weights, f32 accumulation).
    eps = 1e-5
    scale = gamma / jnp.sqrt(running_var + eps)
    w_fold_q = (weight * scale[:, None, None, None]).astype(jnp.bfloat16).astype(jnp.float32)
    x_q = x.astype(jnp.bfloat16).astype(jnp.float32)
    y_q = jax.lax.conv_general_dilated(
        x_q, w_fold_q, window_strides=(1, 1), padding=((1, 1), (1, 1)),
        dimension_numbers=("NCHW", "OIHW", "NCHW"))
    ref_q = jnp.maximum(y_q + (beta - running_mean * scale).reshape(1, -1, 1, 1), 0.0)
    assert jnp.allclose(out, ref_q, atol=2e-3, rtol=2e-3)

    # Sanity check vs full-f32 reference (loose tolerance for bf16 matmul operands).
    ref = _reference_forward(x, weight, gamma, beta, running_mean, running_var)
    assert jnp.allclose(out, ref, atol=5e-2, rtol=5e-2)

    print("KERNEL_OK")
</pallas_src>

<mosaic_0001>
module attributes {stable_mosaic.version = 11 : i64} {
  func.func @_conv_bn_relu_kernel(%arg0: i32, %arg1: i32, %arg2: i32, %arg3: memref<1x1x18x16x128xbf16, #tpu.memory_space<vmem>>, %arg4: memref<3x128x128xbf16, #tpu.memory_space<vmem>>, %arg5: memref<1x128xf32, #tpu.memory_space<vmem>>, %arg6: memref<1x1x256x128xf32, #tpu.memory_space<vmem>>) attributes {dimension_semantics = [#tpu.dimension_semantics<parallel>, #tpu.dimension_semantics<parallel>, #tpu.dimension_semantics<parallel>], iteration_bounds = array<i64: 2, 1, 1>, scalar_prefetch = 0 : i64, scratch_operands = 0 : i64, tpu.core_type = #tpu.core_type<tc>, window_params = [{transform_indices = @transform_0, window_bounds = array<i64: 1, 1, 18, 16, 128>}, {transform_indices = @transform_1, window_bounds = array<i64: 3, 128, 128>}, {transform_indices = @transform_2, window_bounds = array<i64: 1, 128>}, {transform_indices = @transform_3, window_bounds = array<i64: 1, 1, 256, 128>}]} {
    %c0 = arith.constant 0 : index
    %c0_0 = arith.constant 0 : index
    %c0_1 = arith.constant 0 : index
    %c0_2 = arith.constant 0 : index
    %c0_3 = arith.constant 0 : index
    %0 = vector.load %arg3[%c0, %c0_0, %c0_1, %c0_2, %c0_3] : memref<1x1x18x16x128xbf16, #tpu.memory_space<vmem>>, vector<1x1x16x16x128xbf16>
    %1 = vector.shape_cast %0 : vector<1x1x16x16x128xbf16> to vector<16x16x128xbf16>
    %2 = vector.shape_cast %1 : vector<16x16x128xbf16> to vector<256x128xbf16>
    %c0_4 = arith.constant 0 : index
    %c0_5 = arith.constant 0 : index
    %c0_6 = arith.constant 0 : index
    %3 = vector.load %arg4[%c0_4, %c0_5, %c0_6] : memref<3x128x128xbf16, #tpu.memory_space<vmem>>, vector<1x128x128xbf16>
    %4 = vector.shape_cast %3 : vector<1x128x128xbf16> to vector<128x128xbf16>
    %cst = arith.constant dense<0.000000e+00> : vector<256x128xf32>
    %5 = tpu.matmul %2, %4, %cst {dimension_numbers = #tpu.dot_dimension_numbers<[1], [0], [0], [1], [0, 0, 1, 1], [], []>} : vector<256x128xbf16>, vector<128x128xbf16>, vector<256x128xf32> -> vector<256x128xf32>
    %c0_7 = arith.constant 0 : index
    %c0_8 = arith.constant 0 : index
    %c1 = arith.constant 1 : index
    %c0_9 = arith.constant 0 : index
    %c0_10 = arith.constant 0 : index
    %6 = vector.load %arg3[%c0_7, %c0_8, %c1, %c0_9, %c0_10] : memref<1x1x18x16x128xbf16, #tpu.memory_space<vmem>>, vector<1x1x16x16x128xbf16>
    %7 = vector.shape_cast %6 : vector<1x1x16x16x128xbf16> to vector<16x16x128xbf16>
    %8 = vector.shape_cast %7 : vector<16x16x128xbf16> to vector<256x128xbf16>
    %c1_11 = arith.constant 1 : index
    %c0_12 = arith.constant 0 : index
    %c0_13 = arith.constant 0 : index
    %9 = vector.load %arg4[%c1_11, %c0_12, %c0_13] : memref<3x128x128xbf16, #tpu.memory_space<vmem>>, vector<1x128x128xbf16>
    %10 = vector.shape_cast %9 : vector<1x128x128xbf16> to vector<128x128xbf16>
    %cst_14 = arith.constant dense<0.000000e+00> : vector<256x128xf32>
    %11 = tpu.matmul %8, %10, %cst_14 {dimension_numbers = #tpu.dot_dimension_numbers<[1], [0], [0], [1], [0, 0, 1, 1], [], []>} : vector<256x128xbf16>, vector<128x128xbf16>, vector<256x128xf32> -> vector<256x128xf32>
    %12 = arith.addf %5, %11 : vector<256x128xf32>
    %c0_15 = arith.constant 0 : index
    %c0_16 = arith.constant 0 : index
    %c2 = arith.constant 2 : index
    %c0_17 = arith.constant 0 : index
    %c0_18 = arith.constant 0 : index
    %13 = vector.load %arg3[%c0_15, %c0_16, %c2, %c0_17, %c0_18] : memref<1x1x18x16x128xbf16, #tpu.memory_space<vmem>>, vector<1x1x16x16x128xbf16>
    %14 = vector.shape_cast %13 : vector<1x1x16x16x128xbf16> to vector<16x16x128xbf16>
    %15 = vector.shape_cast %14 : vector<16x16x128xbf16> to vector<256x128xbf16>
    %c2_19 = arith.constant 2 : index
    %c0_20 = arith.constant 0 : index
    %c0_21 = arith.constant 0 : index
    %16 = vector.load %arg4[%c2_19, %c0_20, %c0_21] : memref<3x128x128xbf16, #tpu.memory_space<vmem>>, vector<1x128x128xbf16>
    %17 = vector.shape_cast %16 : vector<1x128x128xbf16> to vector<128x128xbf16>
    %cst_22 = arith.constant dense<0.000000e+00> : vector<256x128xf32>
    %18 = tpu.matmul %15, %17, %cst_22 {dimension_numbers = #tpu.dot_dimension_numbers<[1], [0], [0], [1], [0, 0, 1, 1], [], []>} : vector<256x128xbf16>, vector<128x128xbf16>, vector<256x128xf32> -> vector<256x128xf32>
    %19 = arith.addf %12, %18 : vector<256x128xf32>
    %c0_23 = arith.constant 0 : index
    %c0_24 = arith.constant 0 : index
    %20 = vector.load %arg5[%c0_23, %c0_24] : memref<1x128xf32, #tpu.memory_space<vmem>>, vector<1x128xf32>
    %21 = vector.broadcast %20 : vector<1x128xf32> to vector<256x128xf32>
    %22 = arith.addf %19, %21 : vector<256x128xf32>
    %cst_25 = arith.constant 0.000000e+00 : f32
    %23 = vector.broadcast %cst_25 : f32 to vector<256x128xf32>
    %24 = arith.maximumf %22, %23 : vector<256x128xf32>
    %c0_26 = arith.constant 0 : index
    %c0_27 = arith.constant 0 : index
    %c0_28 = arith.constant 0 : index
    %c0_29 = arith.constant 0 : index
    %25 = vector.load %arg6[%c0_26, %c0_27, %c0_28, %c0_29] : memref<1x1x256x128xf32, #tpu.memory_space<vmem>>, vector<1x1x256x128xf32>
    %26 = vector.shape_cast %25 : vector<1x1x256x128xf32> to vector<256x128xf32>
    %27 = vector.shape_cast %24 : vector<256x128xf32> to vector<1x1x256x128xf32>
    tpu.vector_store %arg6[%c0_26, %c0_27, %c0_28, %c0_29], %27 {strides = array<i32>} : memref<1x1x256x128xf32, #tpu.memory_space<vmem>>, vector<1x1x256x128xf32>,
    return
  }
  func.func @transform_0(%arg0: i32, %arg1: i32, %arg2: i32) -> (i32, i32, i32, i32, i32) {
    %c0_i32 = arith.constant 0 : i32
    %c0_i32_0 = arith.constant 0 : i32
    %c0_i32_1 = arith.constant 0 : i32
    %c0_i32_2 = arith.constant 0 : i32
    return %arg0, %arg1, %c0_i32, %c0_i32_0, %c0_i32_1 : i32, i32, i32, i32, i32
  }
  func.func @transform_1(%arg0: i32, %arg1: i32, %arg2: i32) -> (i32, i32, i32) {
    %c0_i32 = arith.constant 0 : i32
    %c0_i32_0 = arith.constant 0 : i32
    %c0_i32_1 = arith.constant 0 : i32
    return %c0_i32, %c0_i32_0, %arg2 : i32, i32, i32
  }
  func.func @transform_2(%arg0: i32, %arg1: i32, %arg2: i32) -> (i32, i32) {
    %c0_i32 = arith.constant 0 : i32
    %c0_i32_0 = arith.constant 0 : i32
    return %c0_i32, %arg2 : i32, i32
  }
  func.func @transform_3(%arg0: i32, %arg1: i32, %arg2: i32) -> (i32, i32, i32, i32) {
    %c0_i32 = arith.constant 0 : i32
    %c0_i32_0 = arith.constant 0 : i32
    return %arg0, %arg1, %c0_i32, %arg2 : i32, i32, i32, i32
  }
}

</mosaic_0001>

<llo_original>
// kernel: tpu_custom_call.1
$region0: #{tpu_custom_call.1}
  #allocation0 [shape = 'u32[]', space=smem, size = 0x4, offset = 0x4, fixed_abs, tag = 'smem constant byte address 0x4 - core index']
  #allocation1 [shape = 'u32[144,128]{1,0:T(1,128)}', space=vmem, size = 0x12000, scoped, tag = 'internal scratch']
  %s0 = inlined_call_operand.hbm [shape: bf16[2,1,18,16,128], index: 0, kind: input, shape index: {}]
  %s1 = inlined_call_operand.hbm [shape: bf16[3,128,128], index: 1, kind: input, shape index: {}]
  %s2 = inlined_call_operand.hbm [shape: f32[1,128], index: 2, kind: input, shape index: {}]
  %s3 = inlined_call_operand.hbm [shape: f32[2,1,256,128], index: 3, kind: output, shape index: {}]
  %s4 = sld [smem:[#allocation0]]
  $region57: #{tpu_custom_call.1} parent=0
    _
  %s6 = ssub.s32 1, %s4
  %s7 = scalar_select 0, %s6, %s4
  $region1: #{tpu_custom_call.1} parent=0
    #allocation2 [shape = 'u8[147456]{0}', space=vmem, size = 0x24000, scoped, tag = 'input window, operand 0']
    #allocation3 [shape = 's32[2]{0}', space=sflag, size = 0x8, scoped, tag = 'scoped memory for tpu_custom_call.1']
    #allocation4 [shape = 's32[2]{0}', space=sflag, size = 0x8, scoped, tag = 'scoped memory for tpu_custom_call.1']
    #allocation5 [shape = 'u8[98304]{0}', space=vmem, size = 0x18000, scoped, tag = 'input window, operand 1, single buffered']
    #allocation6 [shape = 's32[1]{0}', space=sflag, size = 0x4, scoped, tag = 'scoped memory for tpu_custom_call.1']
    #allocation7 [shape = 'u8[512]{0}', space=vmem, size = 0x400, scoped, tag = 'input window, operand 2, single buffered']
    #allocation8 [shape = 'u8[262144]{0}', space=vmem, size = 0x40000, scoped, tag = 'output window, operand 0']
    %8 = vsyncpa [#allocation3], 0
    %s9 = scalar_lea.sflag [#allocation3], 1
    %10 = vsyncpa %s9, 0
    %11 = vsyncpa [#allocation6], 0
    %12 = vsyncpa [#allocation4], 0
    %s13 = scalar_lea.sflag [#allocation4], 1
    %14 = vsyncpa %s13, 0
    loop: start=0, step=1, limit=4
    $region2: #{tpu_custom_call.1} parent=1 // loop_pre_header
      _
    $region3: #{tpu_custom_call.1} parent=1 // loop_header
      %s16 = sphi 0, %s20
      %p17 = scmp.ge.s32.totalorder %s16, 4
      %s23 = sphi 0, %s42
      %s24 = sphi 0, %s38
      %s25 = sphi 0, %s34
      %s26 = sphi 0, %s23
      %s27 = sphi 0, %s24
      %s28 = sphi 0, %s25
      %s29 = sphi 0, %s26
      %s30 = sphi 0, %s27
      %s31 = sphi 0, %s28
      %s47 = sphi 0, %s49
      %s50 = sphi 0, %s47
      %s51 = sphi 0, %s50
      %s67 = sphi 0, %s51
      %s73 = sphi 0, %s75
      %s76 = sphi 0, %s73
      %s77 = sphi 0, %s76
      %s93 = sphi 0, %s77
      %s99 = sphi 0, %s101
      %s102 = sphi 0, %s99
      %s103 = sphi 0, %s102
      %s119 = sphi 0, %s103
      %s129 = sphi 0, %s131
      %s132 = sphi 0, %s129
      %s133 = sphi 0, %s132
      %s149 = sphi 0, %s133
    $region4: #{tpu_custom_call.1} parent=1 // loop_header_branch
      %19 = sbr.rel (%p17) target = $region8
    $region5: #{tpu_custom_call.1} parent=1 // loop_body
      %s21 = ssub.s32 %s16, 1
      %s22 = ssub.s32 %s16, 2
      %s32 = sadd.s32 1, %s25
      %p33 = scmp.ge.s32.totalorder %s32, 1
      %s34 = scalar_select %p33, 0, %s32
      %s35 = sadd.s32 1, %s24
      %s36 = scalar_select %p33, %s35, %s24
      %p37 = scmp.ge.s32.totalorder %s36, 1
      %s38 = scalar_select %p37, 0, %s36
      %s39 = sadd.s32 1, %s23
      %s40 = scalar_select %p37, %s39, %s23
      %p41 = scmp.ge.s32.totalorder %s40, 2
      %s42 = scalar_select %p41, 0, %s40
      %s43 = ssub.s32 %s23, %s42
      %s44 = ssub.s32 %s24, %s38
      %s45 = sor.u32 %s43, %s44
      %p46 = scmp.eq.s32.totalorder %s45, 0
      %s48 = sadd.s32 %s47, 1
      %s49 = scalar_select %p46, %s47, %s48
      %p52 = pneg %p46
      %p53 = scmp.eq.s32.totalorder %s16, 1
      %p54 = por %p52, %p53
      %p55 = scmp.ne.s32.totalorder %s47, %s50
      %p56 = scmp.eq.s32.totalorder %s16, 0
      %p57 = por %p55, %p56
      %p58 = scmp.ne.s32.totalorder %s47, %s50
      %p59 = scmp.eq.s32.totalorder %s21, 1
      %p60 = por %p58, %p59
      %p61 = scmp.ne.s32.totalorder %s50, %s51
      %p62 = scmp.eq.s32.totalorder %s21, 0
      %p63 = por %p61, %p62
      %p64 = scmp.ne.s32.totalorder %s50, %s51
      %p65 = scmp.eq.s32.totalorder %s22, 1
      %p66 = por %p64, %p65
      %p68 = scmp.ne.s32.totalorder %s51, %s67
      %p69 = scmp.eq.s32.totalorder %s22, 0
      %p70 = por %p68, %p69
      %s71 = ssub.s32 %s25, %s34
      %p72 = scmp.eq.s32.totalorder %s71, 0
      %s74 = sadd.s32 %s73, 1
      %s75 = scalar_select %p72, %s73, %s74
      %p78 = pneg %p72
      %p79 = scmp.eq.s32.totalorder %s16, 1
      %p80 = por %p78, %p79
      %p81 = scmp.ne.s32.totalorder %s73, %s76
      %p82 = scmp.eq.s32.totalorder %s16, 0
      %p83 = por %p81, %p82
      %p84 = scmp.ne.s32.totalorder %s73, %s76
      %p85 = scmp.eq.s32.totalorder %s21, 1
      %p86 = por %p84, %p85
      %p87 = scmp.ne.s32.totalorder %s76, %s77
      %p88 = scmp.eq.s32.totalorder %s21, 0
      %p89 = por %p87, %p88
      %p90 = scmp.ne.s32.totalorder %s76, %s77
      %p91 = scmp.eq.s32.totalorder %s22, 1
      %p92 = por %p90, %p91
      %p94 = scmp.ne.s32.totalorder %s77, %s93
      %p95 = scmp.eq.s32.totalorder %s22, 0
      %p96 = por %p94, %p95
      %s97 = ssub.s32 %s25, %s34
      %p98 = scmp.eq.s32.totalorder %s97, 0
      %s100 = sadd.s32 %s99, 1
      %s101 = scalar_select %p98, %s99, %s100
      %p104 = pneg %p98
      %p105 = scmp.eq.s32.totalorder %s16, 1
      %p106 = por %p104, %p105
      %p107 = scmp.ne.s32.totalorder %s99, %s102
      %p108 = scmp.eq.s32.totalorder %s16, 0
      %p109 = por %p107, %p108
      %p110 = scmp.ne.s32.totalorder %s99, %s102
      %p111 = scmp.eq.s32.totalorder %s21, 1
      %p112 = por %p110, %p111
      %p113 = scmp.ne.s32.totalorder %s102, %s103
      %p114 = scmp.eq.s32.totalorder %s21, 0
      %p115 = por %p113, %p114
      %p116 = scmp.ne.s32.totalorder %s102, %s103
      %p117 = scmp.eq.s32.totalorder %s22, 1
      %p118 = por %p116, %p117
      %p120 = scmp.ne.s32.totalorder %s103, %s119
      %p121 = scmp.eq.s32.totalorder %s22, 0
      %p122 = por %p120, %p121
      %s123 = ssub.s32 %s23, %s42
      %s124 = ssub.s32 %s24, %s38
      %s125 = sor.u32 %s123, %s124
      %s126 = ssub.s32 %s25, %s34
      %s127 = sor.u32 %s125, %s126
      %p128 = scmp.eq.s32.totalorder %s127, 0
      %s130 = sadd.s32 %s129, 1
      %s131 = scalar_select %p128, %s129, %s130
      %p134 = pneg %p128
      %p135 = scmp.eq.s32.totalorder %s16, 1
      %p136 = por %p134, %p135
      %p137 = scmp.ne.s32.totalorder %s129, %s132
      %p138 = scmp.eq.s32.totalorder %s16, 0
      %p139 = por %p137, %p138
      %p140 = scmp.ne.s32.totalorder %s129, %s132
      %p141 = scmp.eq.s32.totalorder %s21, 1
      %p142 = por %p140, %p141
      %p143 = scmp.ne.s32.totalorder %s132, %s133
      %p144 = scmp.eq.s32.totalorder %s21, 0
      %p145 = por %p143, %p144
      %p146 = scmp.ne.s32.totalorder %s132, %s133
      %p147 = scmp.eq.s32.totalorder %s22, 1
      %p148 = por %p146, %p147
      %p150 = scmp.ne.s32.totalorder %s133, %s149
      %p151 = scmp.eq.s32.totalorder %s22, 0
      %p152 = por %p150, %p151
      %p153 = scmp.le.s32.totalorder 1, %s16
      %p154 = scmp.lt.s32.totalorder %s16, 3
      %p155 = pnand %p153, %p154
      %p156 = pneg %p155
      // Predicated region
      $region9: #{tpu_custom_call.1} parent=5 // pred_check
        _
      $region10: #{tpu_custom_call.1} parent=5 // pred_check_branch
        %158 = sbr.rel (%p155) target = $region12
      $region11: #{tpu_custom_call.1} parent=5 // pred_region
        %s159 = ssub.s32 %s16, 1
        // Predicated region
        $region13: #{tpu_custom_call.1} parent=11 // pred_check
          %p160 = pneg %p89
        $region14: #{tpu_custom_call.1} parent=11 // pred_check_branch
          %162 = sbr.rel (%p160) target = $region16
        $region15: #{tpu_custom_call.1} parent=11 // pred_region
          %s164 = ssub.s32 3072, 3072
          %165 = vsyncadd [#allocation6], %s164
          %s166 = smul.addr %s28, 64
          %s167 = scalar_lea.hbm %s1, %s166
          %s168 = sshll.u32 [#allocation5], 4
          %s169 = int_to_ptr.vmem [resolvable:$true] %s168
          %174 = dma.hbm_to_vmem [thread:$0]  %s167, 3072, %s169, [#allocation6], 64, 64, 4
        $region16: #{tpu_custom_call.1} parent=11 // pred_fallthru
          _
        // Predicated region
        $region17: #{tpu_custom_call.1} parent=11 // pred_check
          %p175 = pneg %p115
        $region18: #{tpu_custom_call.1} parent=11 // pred_check_branch
          %177 = sbr.rel (%p175) target = $region20
        $region19: #{tpu_custom_call.1} parent=11 // pred_region
          %s179 = ssub.s32 16, 16
          %180 = vsyncadd [#allocation6], %s179
          %s181 = smul.addr %s28, 16
          %s182 = scalar_lea.hbm %s2, %s181
          %s184 = sshll.u32 [#allocation7], 4
          %s185 = int_to_ptr.vmem [resolvable:$true] %s184
          %187 = dma.hbm_to_vmem [thread:$0]  %s182, 16, %s185, [#allocation6]
        $region20: #{tpu_custom_call.1} parent=11 // pred_fallthru
          _
      $region12: #{tpu_custom_call.1} parent=5 // pred_fallthru
        _
      %p188 = scmp.lt.s32.totalorder %s16, 2
      // Predicated region
      $region21: #{tpu_custom_call.1} parent=5 // pred_check
        %p189 = pneg %p188
      $region22: #{tpu_custom_call.1} parent=5 // pred_check_branch
        %191 = sbr.rel (%p189) target = $region24
      $region23: #{tpu_custom_call.1} parent=5 // pred_region
        // Predicated region
        $region25: #{tpu_custom_call.1} parent=23 // pred_check
          %p192 = pneg %p57
        $region26: #{tpu_custom_call.1} parent=23 // pred_check_branch
          %194 = sbr.rel (%p192) target = $region28
        $region27: #{tpu_custom_call.1} parent=23 // pred_region
          %s195 = sand.u32 %s47, 1
          %s196 = scalar_lea.sflag [#allocation3], %s195
          %s197 = sand.u32 %s47, 1
          %s198 = smul.addr %s197, 144
          %s199 = scalar_lea.vmem [#allocation2], %s198
          %s201 = ssub.s32 2304, 2304
          %202 = vsyncadd %s196, %s201
          %s203 = smul.addr %s24, 36
          %s204 = smul.addr %s23, 36
          %s205 = sadd.s32 %s203, %s204
          %s206 = smul.addr %s205, 64
          %s207 = scalar_lea.hbm %s0, %s206
          %s208 = sshll.u32 %s199, 4
          %s209 = int_to_ptr.vmem [resolvable:$true] %s208
          %214 = dma.hbm_to_vmem [thread:$0]  %s207, 2304, %s209, %s196, 64, 64, 4
        $region28: #{tpu_custom_call.1} parent=23 // pred_fallthru
          _
      $region24: #{tpu_custom_call.1} parent=5 // pred_fallthru
        _
      %p215 = scmp.le.s32.totalorder 1, %s16
      %p216 = scmp.lt.s32.totalorder %s16, 3
      %p217 = pnand %p215, %p216
      %p218 = pneg %p217
      // Predicated region
      $region29: #{tpu_custom_call.1} parent=5 // pred_check
        _
      $region30: #{tpu_custom_call.1} parent=5 // pred_check_branch
        %220 = sbr.rel (%p217) target = $region32
      $region31: #{tpu_custom_call.1} parent=5 // pred_region
        %s221 = ssub.s32 %s16, 1
        %s222 = sand.u32 %s50, 1
        %s223 = scalar_lea.sflag [#allocation3], %s222
        %s224 = sand.u32 %s50, 1
        %s225 = smul.addr %s224, 144
        %s226 = scalar_lea.vmem [#allocation2], %s225
        // Predicated region
        $region33: #{tpu_custom_call.1} parent=31 // pred_check
          %p227 = pneg %p63
        $region34: #{tpu_custom_call.1} parent=31 // pred_check_branch
          %229 = sbr.rel (%p227) target = $region36
        $region35: #{tpu_custom_call.1} parent=31 // pred_region
          %230 = dma.done %s223, 2304
        $region36: #{tpu_custom_call.1} parent=31 // pred_fallthru
          _
        // Predicated region
        $region37: #{tpu_custom_call.1} parent=31 // pred_check
          %p231 = pneg %p89
        $region38: #{tpu_custom_call.1} parent=31 // pred_check_branch
          %233 = sbr.rel (%p231) target = $region40
        $region39: #{tpu_custom_call.1} parent=31 // pred_region
          %234 = dma.done [#allocation6], 3072
        $region40: #{tpu_custom_call.1} parent=31 // pred_fallthru
          _
        // Predicated region
        $region41: #{tpu_custom_call.1} parent=31 // pred_check
          %p235 = pneg %p115
        $region42: #{tpu_custom_call.1} parent=31 // pred_check_branch
          %237 = sbr.rel (%p235) target = $region44
        $region43: #{tpu_custom_call.1} parent=31 // pred_region
          %238 = dma.done [#allocation6], 16
        $region44: #{tpu_custom_call.1} parent=31 // pred_fallthru
          _
        %s239 = sand.u32 %s50, 1
        %s240 = scalar_lea.sflag [#allocation3], %s239
        %s241 = sand.u32 %s50, 1
        %s242 = smul.addr %s241, 144
        %s243 = scalar_lea.vmem [#allocation2], %s242
        %p244 = pneg %p63
        %p245 = pneg %p60
        %p246 = pneg %p89
        %p247 = pneg %p86
        %p248 = pneg %p115
        %p249 = pneg %p112
        %p250 = pneg %p145
        %p251 = pneg %p142
        %s252 = sand.u32 %s132, 1
        %s253 = scalar_lea.sflag [#allocation4], %s252
        %s254 = sand.u32 %s132, 1
        %s255 = smul.addr %s254, 256
        %s256 = scalar_lea.vmem [#allocation8], %s255
        %v258 = vld [vmem:[%s226] sm:$0xf]
        %v259 = vld [vmem:[%s226 + $0x4] sm:$0xf]
        %v260 = vld [vmem:[%s226 + $0x8] sm:$0xf]
        %v261 = vld [vmem:[%s226 + $0xc] sm:$0xf]
        %v262 = vld [vmem:[%s226 + $0x10] sm:$0xf]
        %v263 = vld [vmem:[%s226 + $0x14] sm:$0xf]
        %v264 = vld [vmem:[%s226 + $0x18] sm:$0xf]
        %v265 = vld [vmem:[%s226 + $0x1c] sm:$0xf]
        %v266 = vld [vmem:[%s226 + $0x20] sm:$0xf]
        %v267 = vld [vmem:[%s226 + $0x24] sm:$0xf]
        %v268 = vld [vmem:[%s226 + $0x28] sm:$0xf]
        %v269 = vld [vmem:[%s226 + $0x2c] sm:$0xf]
        %v270 = vld [vmem:[%s226 + $0x30] sm:$0xf]
        %v271 = vld [vmem:[%s226 + $0x34] sm:$0xf]
        %v272 = vld [vmem:[%s226 + $0x38] sm:$0xf]
        %v273 = vld [vmem:[%s226 + $0x3c] sm:$0xf]
        %v274 = vld [vmem:[%s226 + $0x40] sm:$0xf]
        %v275 = vld [vmem:[%s226 + $0x44] sm:$0xf]
        %v276 = vld [vmem:[%s226 + $0x48] sm:$0xf]
        %v277 = vld [vmem:[%s226 + $0x4c] sm:$0xf]
        %v278 = vld [vmem:[%s226 + $0x50] sm:$0xf]
        %v279 = vld [vmem:[%s226 + $0x54] sm:$0xf]
        %v280 = vld [vmem:[%s226 + $0x58] sm:$0xf]
        %v281 = vld [vmem:[%s226 + $0x5c] sm:$0xf]
        %v282 = vld [vmem:[%s226 + $0x60] sm:$0xf]
        %v283 = vld [vmem:[%s226 + $0x64] sm:$0xf]
        %v284 = vld [vmem:[%s226 + $0x68] sm:$0xf]
        %v285 = vld [vmem:[%s226 + $0x6c] sm:$0xf]
        %v286 = vld [vmem:[%s226 + $0x70] sm:$0xf]
        %v287 = vld [vmem:[%s226 + $0x74] sm:$0xf]
        %v288 = vld [vmem:[%s226 + $0x78] sm:$0xf]
        %v289 = vld [vmem:[%s226 + $0x7c] sm:$0xf]
        %v290 = vld [vmem:[#allocation5] sm:$0xf]
        %v291 = vld [vmem:[#allocation5 + $0x4] sm:$0xf]
        %v292 = vld [vmem:[#allocation5 + $0x8] sm:$0xf]
        %v293 = vld [vmem:[#allocation5 + $0xc] sm:$0xf]
        %v294 = vld [vmem:[#allocation5 + $0x10] sm:$0xf]
        %v295 = vld [vmem:[#allocation5 + $0x14] sm:$0xf]
        %v296 = vld [vmem:[#allocation5 + $0x18] sm:$0xf]
        %v297 = vld [vmem:[#allocation5 + $0x1c] sm:$0xf]
        %v298 = vld [vmem:[#allocation5 + $0x20] sm:$0xf]
        %v299 = vld [vmem:[#allocation5 + $0x24] sm:$0xf]
        %v300 = vld [vmem:[#allocation5 + $0x28] sm:$0xf]
        %v301 = vld [vmem:[#allocation5 + $0x2c] sm:$0xf]
        %v302 = vld [vmem:[#allocation5 + $0x30] sm:$0xf]
        %v303 = vld [vmem:[#allocation5 + $0x34] sm:$0xf]
        %v304 = vld [vmem:[#allocation5 + $0x38] sm:$0xf]
        %v305 = vld [vmem:[#allocation5 + $0x3c] sm:$0xf]
        %s306 = scalar_lea.vmem %s226, 8 [#allocation2]
        %v307 = vld [vmem:[%s306] sm:$0xf]
        %v308 = vld [vmem:[%s306 + $0x4] sm:$0xf]
        %v309 = vld [vmem:[%s306 + $0x8] sm:$0xf]
        %v310 = vld [vmem:[%s306 + $0xc] sm:$0xf]
        %v311 = vld [vmem:[%s306 + $0x10] sm:$0xf]
        %v312 = vld [vmem:[%s306 + $0x14] sm:$0xf]
        %v313 = vld [vmem:[%s306 + $0x18] sm:$0xf]
        %v314 = vld [vmem:[%s306 + $0x1c] sm:$0xf]
        %v315 = vld [vmem:[%s306 + $0x20] sm:$0xf]
        %v316 = vld [vmem:[%s306 + $0x24] sm:$0xf]
        %v317 = vld [vmem:[%s306 + $0x28] sm:$0xf]
        %v318 = vld [vmem:[%s306 + $0x2c] sm:$0xf]
        %v319 = vld [vmem:[%s306 + $0x30] sm:$0xf]
        %v320 = vld [vmem:[%s306 + $0x34] sm:$0xf]
        %v321 = vld [vmem:[%s306 + $0x38] sm:$0xf]
        %v322 = vld [vmem:[%s306 + $0x3c] sm:$0xf]
        %v323 = vld [vmem:[%s306 + $0x40] sm:$0xf]
        %v324 = vld [vmem:[%s306 + $0x44] sm:$0xf]
        %v325 = vld [vmem:[%s306 + $0x48] sm:$0xf]
        %v326 = vld [vmem:[%s306 + $0x4c] sm:$0xf]
        %v327 = vld [vmem:[%s306 + $0x50] sm:$0xf]
        %v328 = vld [vmem:[%s306 + $0x54] sm:$0xf]
        %v329 = vld [vmem:[%s306 + $0x58] sm:$0xf]
        %v330 = vld [vmem:[%s306 + $0x5c] sm:$0xf]
        %v331 = vld [vmem:[%s306 + $0x60] sm:$0xf]
        %v332 = vld [vmem:[%s306 + $0x64] sm:$0xf]
        %v333 = vld [vmem:[%s306 + $0x68] sm:$0xf]
        %v334 = vld [vmem:[%s306 + $0x6c] sm:$0xf]
        %v335 = vld [vmem:[%s306 + $0x70] sm:$0xf]
        %v336 = vld [vmem:[%s306 + $0x74] sm:$0xf]
        %v337 = vld [vmem:[%s306 + $0x78] sm:$0xf]
        %v338 = vld [vmem:[%s306 + $0x7c] sm:$0xf]
        %s339 = scalar_lea.vmem [#allocation5], 64
        %v340 = vld [vmem:[%s339] sm:$0xf]
        %v341 = vld [vmem:[%s339 + $0x4] sm:$0xf]
        %v342 = vld [vmem:[%s339 + $0x8] sm:$0xf]
        %v343 = vld [vmem:[%s339 + $0xc] sm:$0xf]
        %v344 = vld [vmem:[%s339 + $0x10] sm:$0xf]
        %v345 = vld [vmem:[%s339 + $0x14] sm:$0xf]
        %v346 = vld [vmem:[%s339 + $0x18] sm:$0xf]
        %v347 = vld [vmem:[%s339 + $0x1c] sm:$0xf]
        %v348 = vld [vmem:[%s339 + $0x20] sm:$0xf]
        %v349 = vld [vmem:[%s339 + $0x24] sm:$0xf]
        %v350 = vld [vmem:[%s339 + $0x28] sm:$0xf]
        %v351 = vld [vmem:[%s339 + $0x2c] sm:$0xf]
        %v352 = vld [vmem:[%s339 + $0x30] sm:$0xf]
        %v353 = vld [vmem:[%s339 + $0x34] sm:$0xf]
        %v354 = vld [vmem:[%s339 + $0x38] sm:$0xf]
        %v355 = vld [vmem:[%s339 + $0x3c] sm:$0xf]
        %v388 = vunpack.c.l.b16 %v307
        %v389 = vunpack.c.l.b16 %v308
        %v390 = vunpack.c.l.b16 %v309
        %v391 = vunpack.c.l.b16 %v310
        %v392 = vunpack.c.l.b16 %v311
        %v393 = vunpack.c.l.b16 %v312
        %v394 = vunpack.c.l.b16 %v313
        %v395 = vunpack.c.l.b16 %v314
        %v396 = vunpack.c.l.b16 %v315
        %v397 = vunpack.c.l.b16 %v316
        %v398 = vunpack.c.l.b16 %v317
        %v399 = vunpack.c.l.b16 %v318
        %v400 = vunpack.c.l.b16 %v319
        %v401 = vunpack.c.l.b16 %v320
        %v402 = vunpack.c.l.b16 %v321
        %v403 = vunpack.c.l.b16 %v322
        %v404 = vunpack.c.l.b16 %v323
        %v405 = vunpack.c.l.b16 %v324
        %v406 = vunpack.c.l.b16 %v325
        %v407 = vunpack.c.l.b16 %v326
        %v408 = vunpack.c.l.b16 %v327
        %v409 = vunpack.c.l.b16 %v328
        %v410 = vunpack.c.l.b16 %v329
        %v411 = vunpack.c.l.b16 %v330
        %v412 = vunpack.c.l.b16 %v331
        %v413 = vunpack.c.l.b16 %v332
        %v414 = vunpack.c.l.b16 %v333
        %v415 = vunpack.c.l.b16 %v334
        %v416 = vunpack.c.l.b16 %v335
        %v417 = vunpack.c.l.b16 %v336
        %v418 = vunpack.c.l.b16 %v337
        %v419 = vunpack.c.l.b16 %v338
        %v420 = vpack.c.b16 %v389, %v388
        %v421 = vpack.c.b16 %v391, %v390
        %v422 = vpack.c.b16 %v393, %v392
        %v423 = vpack.c.b16 %v395, %v394
        %v424 = vpack.c.b16 %v397, %v396
        %v425 = vpack.c.b16 %v399, %v398
        %v426 = vpack.c.b16 %v401, %v400
        %v427 = vpack.c.b16 %v403, %v402
        %v428 = vpack.c.b16 %v405, %v404
        %v429 = vpack.c.b16 %v407, %v406
        %v430 = vpack.c.b16 %v409, %v408
        %v431 = vpack.c.b16 %v411, %v410
        %v432 = vpack.c.b16 %v413, %v412
        %v433 = vpack.c.b16 %v415, %v414
        %v434 = vpack.c.b16 %v417, %v416
        %v435 = vpack.c.b16 %v419, %v418
        %v468 = vunpack.c.l.b16 %v340
        %v469 = vunpack.c.l.b16 %v341
        %v470 = vunpack.c.l.b16 %v342
        %v471 = vunpack.c.l.b16 %v343
        %v472 = vunpack.c.l.b16 %v344
        %v473 = vunpack.c.l.b16 %v345
        %v474 = vunpack.c.l.b16 %v346
        %v475 = vunpack.c.l.b16 %v347
        %v476 = vunpack.c.l.b16 %v348
        %v477 = vunpack.c.l.b16 %v349
        %v478 = vunpack.c.l.b16 %v350
        %v479 = vunpack.c.l.b16 %v351
        %v480 = vunpack.c.l.b16 %v352
        %v481 = vunpack.c.l.b16 %v353
        %v482 = vunpack.c.l.b16 %v354
        %v483 = vunpack.c.l.b16 %v355
        %v484 = vpack.c.b16 %v469, %v468
        %v485 = vpack.c.b16 %v471, %v470
        %v486 = vpack.c.b16 %v473, %v472
        %v487 = vpack.c.b16 %v475, %v474
        %v488 = vpack.c.b16 %v477, %v476
        %v489 = vpack.c.b16 %v479, %v478
        %v490 = vpack.c.b16 %v481, %v480
        %v491 = vpack.c.b16 %v483, %v482
        %500 = vmatprep.subr.bf16.mxu0 0
        %501 = vmatpush1.bf16.msra.mxu0 %v484
        %502 = vmatprep.subr.bf16.mxu0 0
        %503 = vmatpush1.bf16.msra.mxu0 %v485
        %504 = vmatprep.subr.bf16.mxu0 0
        %505 = vmatpush1.bf16.msra.mxu0 %v486
        %506 = vmatprep.subr.bf16.mxu0 0
        %507 = vmatpush1.bf16.msra.mxu0 %v487
        %508 = vmatprep.subr.bf16.mxu0 0
        %509 = vmatpush1.bf16.msra.mxu0 %v488
        %510 = vmatprep.subr.bf16.mxu0 0
        %511 = vmatpush1.bf16.msra.mxu0 %v489
        %512 = vmatprep.subr.bf16.mxu0 0
        %513 = vmatpush1.bf16.msra.mxu0 %v490
        %514 = vmatprep.subr.bf16.mxu0 0
        %515 = vmatpush1.bf16.msra.mxu0 %v491
        %516 = vmatprep.subr.bf16.mxu0 0
        %517 = vmatpush1.bf16.msra.mxu0 0
        %518 = vmatprep.subr.bf16.mxu0 0
        %519 = vmatpush1.bf16.msra.mxu0 0
        %520 = vmatprep.subr.bf16.mxu0 0
        %521 = vmatpush1.bf16.msra.mxu0 0
        %522 = vmatprep.subr.bf16.mxu0 0
        %523 = vmatpush1.bf16.msra.mxu0 0
        %524 = vmatprep.subr.bf16.mxu0 0
        %525 = vmatpush1.bf16.msra.mxu0 0
        %526 = vmatprep.subr.bf16.mxu0 0
        %527 = vmatpush1.bf16.msra.mxu0 0
        %528 = vmatprep.subr.bf16.mxu0 0
        %529 = vmatpush1.bf16.msra.mxu0 0
        %530 = vmatprep.subr.bf16.mxu0 0
        %531 = vmatpush1.bf16.msra.mxu0 0
        %532 = vmatprep.mubr.bf16.mxu0 0
        %533 = vmatmul.mubr.bf16.gmra.mrb[0].mxu0 %v420
        %v534 = vpop.f32.mrb[0].mxu0
        %v535 = vadd.f32 0.0, %v534
        %v536 = vpop.f32.mrb[0].mxu0
        %v537 = vpop.f32.mrb[0].mxu0
        %v538 = vadd.f32 0.0, %v537
        %v539 = vpop.f32.mrb[0].mxu0
        %540 = vmatprep.mubr.bf16.mxu0 0
        %541 = vmatmul.mubr.bf16.gmra.mrb[0].mxu0 %v421
        %v542 = vpop.f32.mrb[0].mxu0
        %v543 = vadd.f32 0.0, %v542
        %v544 = vpop.f32.mrb[0].mxu0
        %v545 = vpop.f32.mrb[0].mxu0
        %v546 = vadd.f32 0.0, %v545
        %v547 = vpop.f32.mrb[0].mxu0
        %548 = vmatprep.mubr.bf16.mxu0 0
        %549 = vmatmul.mubr.bf16.gmra.mrb[0].mxu0 %v422
        %v550 = vpop.f32.mrb[0].mxu0
        %v551 = vadd.f32 0.0, %v550
        %v552 = vpop.f32.mrb[0].mxu0
        %v553 = vpop.f32.mrb[0].mxu0
        %v554 = vadd.f32 0.0, %v553
        %v555 = vpop.f32.mrb[0].mxu0
        %556 = vmatprep.mubr.bf16.mxu0 0
        %557 = vmatmul.mubr.bf16.gmra.mrb[0].mxu0 %v423
        %v558 = vpop.f32.mrb[0].mxu0
        %v559 = vadd.f32 0.0, %v558
        %v560 = vpop.f32.mrb[0].mxu0
        %v561 = vpop.f32.mrb[0].mxu0
        %v562 = vadd.f32 0.0, %v561
        %v563 = vpop.f32.mrb[0].mxu0
        %564 = vmatprep.mubr.bf16.mxu0 0
        %565 = vmatmul.mubr.bf16.gmra.mrb[0].mxu0 %v424
        %v566 = vpop.f32.mrb[0].mxu0
        %v567 = vadd.f32 0.0, %v566
        %v568 = vpop.f32.mrb[0].mxu0
        %v569 = vpop.f32.mrb[0].mxu0
        %v570 = vadd.f32 0.0, %v569
        %v571 = vpop.f32.mrb[0].mxu0
        %572 = vmatprep.mubr.bf16.mxu0 0
        %573 = vmatmul.mubr.bf16.gmra.mrb[0].mxu0 %v425
        %v574 = vpop.f32.mrb[0].mxu0
        %v575 = vadd.f32 0.0, %v574
        %v576 = vpop.f32.mrb[0].mxu0
        %v577 = vpop.f32.mrb[0].mxu0
        %v578 = vadd.f32 0.0, %v577
        %v579 = vpop.f32.mrb[0].mxu0
        %580 = vmatprep.mubr.bf16.mxu0 0
        %581 = vmatmul.mubr.bf16.gmra.mrb[0].mxu0 %v426
        %v582 = vpop.f32.mrb[0].mxu0
        %v583 = vadd.f32 0.0, %v582
        %v584 = vpop.f32.mrb[0].mxu0
        %v585 = vpop.f32.mrb[0].mxu0
        %v586 = vadd.f32 0.0, %v585
        %v587 = vpop.f32.mrb[0].mxu0
        %588 = vmatprep.mubr.bf16.mxu0 0
        %589 = vmatmul.mubr.bf16.gmra.mrb[0].mxu0 %v427
        %v590 = vpop.f32.mrb[0].mxu0
        %v591 = vadd.f32 0.0, %v590
        %v592 = vpop.f32.mrb[0].mxu0
        %v593 = vpop.f32.mrb[0].mxu0
        %v594 = vadd.f32 0.0, %v593
        %v595 = vpop.f32.mrb[0].mxu0
        %596 = vmatprep.mubr.bf16.mxu0 0
        %597 = vmatmul.mubr.bf16.gmra.mrb[0].mxu0 %v428
        %v598 = vpop.f32.mrb[0].mxu0
        %v599 = vadd.f32 0.0, %v598
        %v600 = vpop.f32.mrb[0].mxu0
        %v601 = vpop.f32.mrb[0].mxu0
        %v602 = vadd.f32 0.0, %v601
        %v603 = vpop.f32.mrb[0].mxu0
        %604 = vmatprep.mubr.bf16.mxu0 0
        %605 = vmatmul.mubr.bf16.gmra.mrb[0].mxu0 %v429
        %v606 = vpop.f32.mrb[0].mxu0
        %v607 = vadd.f32 0.0, %v606
        %v608 = vpop.f32.mrb[0].mxu0
        %v609 = vpop.f32.mrb[0].mxu0
        %v610 = vadd.f32 0.0, %v609
        %v611 = vpop.f32.mrb[0].mxu0
        %612 = vmatprep.mubr.bf16.mxu0 0
        %613 = vmatmul.mubr.bf16.gmra.mrb[0].mxu0 %v430
        %v614 = vpop.f32.mrb[0].mxu0
        %v615 = vadd.f32 0.0, %v614
        %v616 = vpop.f32.mrb[0].mxu0
        %v617 = vpop.f32.mrb[0].mxu0
        %v618 = vadd.f32 0.0, %v617
        %v619 = vpop.f32.mrb[0].mxu0
        %620 = vmatprep.mubr.bf16.mxu0 0
        %621 = vmatmul.mubr.bf16.gmra.mrb[0].mxu0 %v431
        %v622 = vpop.f32.mrb[0].mxu0
        %v623 = vadd.f32 0.0, %v622
        %v624 = vpop.f32.mrb[0].mxu0
        %v625 = vpop.f32.mrb[0].mxu0
        %v626 = vadd.f32 0.0, %v625
        %v627 = vpop.f32.mrb[0].mxu0
        %628 = vmatprep.mubr.bf16.mxu0 0
        %629 = vmatmul.mubr.bf16.gmra.mrb[0].mxu0 %v432
        %v630 = vpop.f32.mrb[0].mxu0
        %v631 = vadd.f32 0.0, %v630
        %v632 = vpop.f32.mrb[0].mxu0
        %v633 = vpop.f32.mrb[0].mxu0
        %v634 = vadd.f32 0.0, %v633
        %v635 = vpop.f32.mrb[0].mxu0
        %636 = vmatprep.mubr.bf16.mxu0 0
        %637 = vmatmul.mubr.bf16.gmra.mrb[0].mxu0 %v433
        %v638 = vpop.f32.mrb[0].mxu0
        %v639 = vadd.f32 0.0, %v638
        %v640 = vpop.f32.mrb[0].mxu0
        %v641 = vpop.f32.mrb[0].mxu0
        %v642 = vadd.f32 0.0, %v641
        %v643 = vpop.f32.mrb[0].mxu0
        %644 = vmatprep.mubr.bf16.mxu0 0
        %645 = vmatmul.mubr.bf16.gmra.mrb[0].mxu0 %v434
        %v646 = vpop.f32.mrb[0].mxu0
        %v647 = vadd.f32 0.0, %v646
        %v648 = vpop.f32.mrb[0].mxu0
        %v649 = vpop.f32.mrb[0].mxu0
        %v650 = vadd.f32 0.0, %v649
        %v651 = vpop.f32.mrb[0].mxu0
        %652 = vmatprep.mubr.bf16.mxu0 0
        %653 = vmatmul.mubr.bf16.gmra.mrb[0].mxu0 %v435
        %v654 = vpop.f32.mrb[0].mxu0
        %v655 = vadd.f32 0.0, %v654
        %v656 = vpop.f32.mrb[0].mxu0
        %v657 = vpop.f32.mrb[0].mxu0
        %v658 = vadd.f32 0.0, %v657
        %v659 = vpop.f32.mrb[0].mxu0
        %660 = vdwg.mxu0
        %v693 = vunpack.c.l.b16 %v258
        %v694 = vunpack.c.l.b16 %v259
        %v695 = vunpack.c.l.b16 %v260
        %v696 = vunpack.c.l.b16 %v261
        %v697 = vunpack.c.l.b16 %v262
        %v698 = vunpack.c.l.b16 %v263
        %v699 = vunpack.c.l.b16 %v264
        %v700 = vunpack.c.l.b16 %v265
        %v701 = vunpack.c.l.b16 %v266
        %v702 = vunpack.c.l.b16 %v267
        %v703 = vunpack.c.l.b16 %v268
        %v704 = vunpack.c.l.b16 %v269
        %v705 = vunpack.c.l.b16 %v270
        %v706 = vunpack.c.l.b16 %v271
        %v707 = vunpack.c.l.b16 %v272
        %v708 = vunpack.c.l.b16 %v273
        %v709 = vunpack.c.l.b16 %v274
        %v710 = vunpack.c.l.b16 %v275
        %v711 = vunpack.c.l.b16 %v276
        %v712 = vunpack.c.l.b16 %v277
        %v713 = vunpack.c.l.b16 %v278
        %v714 = vunpack.c.l.b16 %v279
        %v715 = vunpack.c.l.b16 %v280
        %v716 = vunpack.c.l.b16 %v281
        %v717 = vunpack.c.l.b16 %v282
        %v718 = vunpack.c.l.b16 %v283
        %v719 = vunpack.c.l.b16 %v284
        %v720 = vunpack.c.l.b16 %v285
        %v721 = vunpack.c.l.b16 %v286
        %v722 = vunpack.c.l.b16 %v287
        %v723 = vunpack.c.l.b16 %v288
        %v724 = vunpack.c.l.b16 %v289
        %v725 = vpack.c.b16 %v694, %v693
        %v726 = vpack.c.b16 %v696, %v695
        %v727 = vpack.c.b16 %v698, %v697
        %v728 = vpack.c.b16 %v700, %v699
        %v729 = vpack.c.b16 %v702, %v701
        %v730 = vpack.c.b16 %v704, %v703
        %v731 = vpack.c.b16 %v706, %v705
        %v732 = vpack.c.b16 %v708, %v707
        %v733 = vpack.c.b16 %v710, %v709
        %v734 = vpack.c.b16 %v712, %v711
        %v735 = vpack.c.b16 %v714, %v713
        %v736 = vpack.c.b16 %v716, %v715
        %v737 = vpack.c.b16 %v718, %v717
        %v738 = vpack.c.b16 %v720, %v719
        %v739 = vpack.c.b16 %v722, %v721
        %v740 = vpack.c.b16 %v724, %v723
        %v773 = vunpack.c.l.b16 %v290
        %v774 = vunpack.c.l.b16 %v291
        %v775 = vunpack.c.l.b16 %v292
        %v776 = vunpack.c.l.b16 %v293
        %v777 = vunpack.c.l.b16 %v294
        %v778 = vunpack.c.l.b16 %v295
        %v779 = vunpack.c.l.b16 %v296
        %v780 = vunpack.c.l.b16 %v297
        %v781 = vunpack.c.l.b16 %v298
        %v782 = vunpack.c.l.b16 %v299
        %v783 = vunpack.c.l.b16 %v300
        %v784 = vunpack.c.l.b16 %v301
        %v785 = vunpack.c.l.b16 %v302
        %v786 = vunpack.c.l.b16 %v303
        %v787 = vunpack.c.l.b16 %v304
        %v788 = vunpack.c.l.b16 %v305
        %v789 = vpack.c.b16 %v774, %v773
        %v790 = vpack.c.b16 %v776, %v775
        %v791 = vpack.c.b16 %v778, %v777
        %v792 = vpack.c.b16 %v780, %v779
        %v793 = vpack.c.b16 %v782, %v781
        %v794 = vpack.c.b16 %v784, %v783
        %v795 = vpack.c.b16 %v786, %v785
        %v796 = vpack.c.b16 %v788, %v787
        %805 = vmatprep.subr.bf16.mxu0 0
        %806 = vmatpush1.bf16.msra.mxu0 %v789
        %807 = vmatprep.subr.bf16.mxu0 0
        %808 = vmatpush1.bf16.msra.mxu0 %v790
        %809 = vmatprep.subr.bf16.mxu0 0
        %810 = vmatpush1.bf16.msra.mxu0 %v791
        %811 = vmatprep.subr.bf16.mxu0 0
        %812 = vmatpush1.bf16.msra.mxu0 %v792
        %813 = vmatprep.subr.bf16.mxu0 0
        %814 = vmatpush1.bf16.msra.mxu0 %v793
        %815 = vmatprep.subr.bf16.mxu0 0
        %816 = vmatpush1.bf16.msra.mxu0 %v794
        %817 = vmatprep.subr.bf16.mxu0 0
        %818 = vmatpush1.bf16.msra.mxu0 %v795
        %819 = vmatprep.subr.bf16.mxu0 0
        %820 = vmatpush1.bf16.msra.mxu0 %v796
        %821 = vmatprep.subr.bf16.mxu0 0
        %822 = vmatpush1.bf16.msra.mxu0 0
        %823 = vmatprep.subr.bf16.mxu0 0
        %824 = vmatpush1.bf16.msra.mxu0 0
        %825 = vmatprep.subr.bf16.mxu0 0
        %826 = vmatpush1.bf16.msra.mxu0 0
        %827 = vmatprep.subr.bf16.mxu0 0
        %828 = vmatpush1.bf16.msra.mxu0 0
        %829 = vmatprep.subr.bf16.mxu0 0
        %830 = vmatpush1.bf16.msra.mxu0 0
        %831 = vmatprep.subr.bf16.mxu0 0
        %832 = vmatpush1.bf16.msra.mxu0 0
        %833 = vmatprep.subr.bf16.mxu0 0
        %834 = vmatpush1.bf16.msra.mxu0 0
        %835 = vmatprep.subr.bf16.mxu0 0
        %836 = vmatpush1.bf16.msra.mxu0 0
        %837 = vmatprep.mubr.bf16.mxu0 0
        %838 = vmatmul.mubr.bf16.gmra.mrb[0].mxu0 %v725
        %v839 = vpop.f32.mrb[0].mxu0
        %v840 = vadd.f32 %v535, %v839
        %v841 = vpop.f32.mrb[0].mxu0
        %v842 = vpop.f32.mrb[0].mxu0
        %v843 = vadd.f32 %v538, %v842
        %v844 = vpop.f32.mrb[0].mxu0
        %845 = vmatprep.mubr.bf16.mxu0 0
        %846 = vmatmul.mubr.bf16.gmra.mrb[0].mxu0 %v726
        %v847 = vpop.f32.mrb[0].mxu0
        %v848 = vadd.f32 %v543, %v847
        %v849 = vpop.f32.mrb[0].mxu0
        %v850 = vpop.f32.mrb[0].mxu0
        %v851 = vadd.f32 %v546, %v850
        %v852 = vpop.f32.mrb[0].mxu0
        %853 = vmatprep.mubr.bf16.mxu0 0
        %854 = vmatmul.mubr.bf16.gmra.mrb[0].mxu0 %v727
        %v855 = vpop.f32.mrb[0].mxu0
        %v856 = vadd.f32 %v551, %v855
        %v857 = vpop.f32.mrb[0].mxu0
        %v858 = vpop.f32.mrb[0].mxu0
        %v859 = vadd.f32 %v554, %v858
        %v860 = vpop.f32.mrb[0].mxu0
        %861 = vmatprep.mubr.bf16.mxu0 0
        %862 = vmatmul.mubr.bf16.gmra.mrb[0].mxu0 %v728
        %v863 = vpop.f32.mrb[0].mxu0
        %v864 = vadd.f32 %v559, %v863
        %v865 = vpop.f32.mrb[0].mxu0
        %v866 = vpop.f32.mrb[0].mxu0
        %v867 = vadd.f32 %v562, %v866
        %v868 = vpop.f32.mrb[0].mxu0
        %869 = vmatprep.mubr.bf16.mxu0 0
        %870 = vmatmul.mubr.bf16.gmra.mrb[0].mxu0 %v729
        %v871 = vpop.f32.mrb[0].mxu0
        %v872 = vadd.f32 %v567, %v871
        %v873 = vpop.f32.mrb[0].mxu0
        %v874 = vpop.f32.mrb[0].mxu0
        %v875 = vadd.f32 %v570, %v874
        %v876 = vpop.f32.mrb[0].mxu0
        %877 = vmatprep.mubr.bf16.mxu0 0
        %878 = vmatmul.mubr.bf16.gmra.mrb[0].mxu0 %v730
        %v879 = vpop.f32.mrb[0].mxu0
        %v880 = vadd.f32 %v575, %v879
        %v881 = vpop.f32.mrb[0].mxu0
        %v882 = vpop.f32.mrb[0].mxu0
        %v883 = vadd.f32 %v578, %v882
        %v884 = vpop.f32.mrb[0].mxu0
        %885 = vmatprep.mubr.bf16.mxu0 0
        %886 = vmatmul.mubr.bf16.gmra.mrb[0].mxu0 %v731
        %v887 = vpop.f32.mrb[0].mxu0
        %v888 = vadd.f32 %v583, %v887
        %v889 = vpop.f32.mrb[0].mxu0
        %v890 = vpop.f32.mrb[0].mxu0
        %v891 = vadd.f32 %v586, %v890
        %v892 = vpop.f32.mrb[0].mxu0
        %893 = vmatprep.mubr.bf16.mxu0 0
        %894 = vmatmul.mubr.bf16.gmra.mrb[0].mxu0 %v732
        %v895 = vpop.f32.mrb[0].mxu0
        %v896 = vadd.f32 %v591, %v895
        %v897 = vpop.f32.mrb[0].mxu0
        %v898 = vpop.f32.mrb[0].mxu0
        %v899 = vadd.f32 %v594, %v898
        %v900 = vpop.f32.mrb[0].mxu0
        %901 = vmatprep.mubr.bf16.mxu0 0
        %902 = vmatmul.mubr.bf16.gmra.mrb[0].mxu0 %v733
        %v903 = vpop.f32.mrb[0].mxu0
        %v904 = vadd.f32 %v599, %v903
        %v905 = vpop.f32.mrb[0].mxu0
        %v906 = vpop.f32.mrb[0].mxu0
        %v907 = vadd.f32 %v602, %v906
        %v908 = vpop.f32.mrb[0].mxu0
        %909 = vmatprep.mubr.bf16.mxu0 0
        %910 = vmatmul.mubr.bf16.gmra.mrb[0].mxu0 %v734
        %v911 = vpop.f32.mrb[0].mxu0
        %v912 = vadd.f32 %v607, %v911
        %v913 = vpop.f32.mrb[0].mxu0
        %v914 = vpop.f32.mrb[0].mxu0
        %v915 = vadd.f32 %v610, %v914
        %v916 = vpop.f32.mrb[0].mxu0
        %917 = vmatprep.mubr.bf16.mxu0 0
        %918 = vmatmul.mubr.bf16.gmra.mrb[0].mxu0 %v735
        %v919 = vpop.f32.mrb[0].mxu0
        %v920 = vadd.f32 %v615, %v919
        %v921 = vpop.f32.mrb[0].mxu0
        %v922 = vpop.f32.mrb[0].mxu0
        %v923 = vadd.f32 %v618, %v922
        %v924 = vpop.f32.mrb[0].mxu0
        %925 = vmatprep.mubr.bf16.mxu0 0
        %926 = vmatmul.mubr.bf16.gmra.mrb[0].mxu0 %v736
        %v927 = vpop.f32.mrb[0].mxu0
        %v928 = vadd.f32 %v623, %v927
        %v929 = vpop.f32.mrb[0].mxu0
        %v930 = vpop.f32.mrb[0].mxu0
        %v931 = vadd.f32 %v626, %v930
        %v932 = vpop.f32.mrb[0].mxu0
        %933 = vmatprep.mubr.bf16.mxu0 0
        %934 = vmatmul.mubr.bf16.gmra.mrb[0].mxu0 %v737
        %v935 = vpop.f32.mrb[0].mxu0
        %v936 = vadd.f32 %v631, %v935
        %v937 = vpop.f32.mrb[0].mxu0
        %v938 = vpop.f32.mrb[0].mxu0
        %v939 = vadd.f32 %v634, %v938
        %v940 = vpop.f32.mrb[0].mxu0
        %941 = vmatprep.mubr.bf16.mxu0 0
        %942 = vmatmul.mubr.bf16.gmra.mrb[0].mxu0 %v738
        %v943 = vpop.f32.mrb[0].mxu0
        %v944 = vadd.f32 %v639, %v943
        %v945 = vpop.f32.mrb[0].mxu0
        %v946 = vpop.f32.mrb[0].mxu0
        %v947 = vadd.f32 %v642, %v946
        %v948 = vpop.f32.mrb[0].mxu0
        %949 = vmatprep.mubr.bf16.mxu0 0
        %950 = vmatmul.mubr.bf16.gmra.mrb[0].mxu0 %v739
        %v951 = vpop.f32.mrb[0].mxu0
        %v952 = vadd.f32 %v647, %v951
        %v953 = vpop.f32.mrb[0].mxu0
        %v954 = vpop.f32.mrb[0].mxu0
        %v955 = vadd.f32 %v650, %v954
        %v956 = vpop.f32.mrb[0].mxu0
        %957 = vmatprep.mubr.bf16.mxu0 0
        %958 = vmatmul.mubr.bf16.gmra.mrb[0].mxu0 %v740
        %v959 = vpop.f32.mrb[0].mxu0
        %v960 = vadd.f32 %v655, %v959
        %v961 = vpop.f32.mrb[0].mxu0
        %v962 = vpop.f32.mrb[0].mxu0
        %v963 = vadd.f32 %v658, %v962
        %v964 = vpop.f32.mrb[0].mxu0
        %965 = vdwg.mxu0
        %s966 = scalar_lea.vmem %s226, 16 [#allocation2]
        %v967 = vld [vmem:[%s966] sm:$0xf]
        %v968 = vld [vmem:[%s966 + $0x4] sm:$0xf]
        %v969 = vld [vmem:[%s966 + $0x8] sm:$0xf]
        %v970 = vld [vmem:[%s966 + $0xc] sm:$0xf]
        %v971 = vld [vmem:[%s966 + $0x10] sm:$0xf]
        %v972 = vld [vmem:[%s966 + $0x14] sm:$0xf]
        %v973 = vld [vmem:[%s966 + $0x18] sm:$0xf]
        %v974 = vld [vmem:[%s966 + $0x1c] sm:$0xf]
        %v975 = vld [vmem:[%s966 + $0x20] sm:$0xf]
        %v976 = vld [vmem:[%s966 + $0x24] sm:$0xf]
        %v977 = vld [vmem:[%s966 + $0x28] sm:$0xf]
        %v978 = vld [vmem:[%s966 + $0x2c] sm:$0xf]
        %v979 = vld [vmem:[%s966 + $0x30] sm:$0xf]
        %v980 = vld [vmem:[%s966 + $0x34] sm:$0xf]
        %v981 = vld [vmem:[%s966 + $0x38] sm:$0xf]
        %v982 = vld [vmem:[%s966 + $0x3c] sm:$0xf]
        %v983 = vld [vmem:[%s966 + $0x40] sm:$0xf]
        %v984 = vld [vmem:[%s966 + $0x44] sm:$0xf]
        %v985 = vld [vmem:[%s966 + $0x48] sm:$0xf]
        %v986 = vld [vmem:[%s966 + $0x4c] sm:$0xf]
        %v987 = vld [vmem:[%s966 + $0x50] sm:$0xf]
        %v988 = vld [vmem:[%s966 + $0x54] sm:$0xf]
        %v989 = vld [vmem:[%s966 + $0x58] sm:$0xf]
        %v990 = vld [vmem:[%s966 + $0x5c] sm:$0xf]
        %v991 = vld [vmem:[%s966 + $0x60] sm:$0xf]
        %v992 = vld [vmem:[%s966 + $0x64] sm:$0xf]
        %v993 = vld [vmem:[%s966 + $0x68] sm:$0xf]
        %v994 = vld [vmem:[%s966 + $0x6c] sm:$0xf]
        %v995 = vld [vmem:[%s966 + $0x70] sm:$0xf]
        %v996 = vld [vmem:[%s966 + $0x74] sm:$0xf]
        %v997 = vld [vmem:[%s966 + $0x78] sm:$0xf]
        %v998 = vld [vmem:[%s966 + $0x7c] sm:$0xf]
        %s999 = scalar_lea.vmem [#allocation5], 128
        %v1000 = vld [vmem:[%s999] sm:$0xf]
        %v1001 = vld [vmem:[%s999 + $0x4] sm:$0xf]
        %v1002 = vld [vmem:[%s999 + $0x8] sm:$0xf]
        %v1003 = vld [vmem:[%s999 + $0xc] sm:$0xf]
        %v1004 = vld [vmem:[%s999 + $0x10] sm:$0xf]
        %v1005 = vld [vmem:[%s999 + $0x14] sm:$0xf]
        %v1006 = vld [vmem:[%s999 + $0x18] sm:$0xf]
        %v1007 = vld [vmem:[%s999 + $0x1c] sm:$0xf]
        %v1008 = vld [vmem:[%s999 + $0x20] sm:$0xf]
        %v1009 = vld [vmem:[%s999 + $0x24] sm:$0xf]
        %v1010 = vld [vmem:[%s999 + $0x28] sm:$0xf]
        %v1011 = vld [vmem:[%s999 + $0x2c] sm:$0xf]
        %v1012 = vld [vmem:[%s999 + $0x30] sm:$0xf]
        %v1013 = vld [vmem:[%s999 + $0x34] sm:$0xf]
        %v1014 = vld [vmem:[%s999 + $0x38] sm:$0xf]
        %v1015 = vld [vmem:[%s999 + $0x3c] sm:$0xf]
        %v1048 = vunpack.c.l.b16 %v967
        %v1049 = vunpack.c.l.b16 %v968
        %v1050 = vunpack.c.l.b16 %v969
        %v1051 = vunpack.c.l.b16 %v970
        %v1052 = vunpack.c.l.b16 %v971
        %v1053 = vunpack.c.l.b16 %v972
        %v1054 = vunpack.c.l.b16 %v973
        %v1055 = vunpack.c.l.b16 %v974
        %v1056 = vunpack.c.l.b16 %v975
        %v1057 = vunpack.c.l.b16 %v976
        %v1058 = vunpack.c.l.b16 %v977
        %v1059 = vunpack.c.l.b16 %v978
        %v1060 = vunpack.c.l.b16 %v979
        %v1061 = vunpack.c.l.b16 %v980
        %v1062 = vunpack.c.l.b16 %v981
        %v1063 = vunpack.c.l.b16 %v982
        %v1064 = vunpack.c.l.b16 %v983
        %v1065 = vunpack.c.l.b16 %v984
        %v1066 = vunpack.c.l.b16 %v985
        %v1067 = vunpack.c.l.b16 %v986
        %v1068 = vunpack.c.l.b16 %v987
        %v1069 = vunpack.c.l.b16 %v988
        %v1070 = vunpack.c.l.b16 %v989
        %v1071 = vunpack.c.l.b16 %v990
        %v1072 = vunpack.c.l.b16 %v991
        %v1073 = vunpack.c.l.b16 %v992
        %v1074 = vunpack.c.l.b16 %v993
        %v1075 = vunpack.c.l.b16 %v994
        %v1076 = vunpack.c.l.b16 %v995
        %v1077 = vunpack.c.l.b16 %v996
        %v1078 = vunpack.c.l.b16 %v997
        %v1079 = vunpack.c.l.b16 %v998
        %v1080 = vpack.c.b16 %v1049, %v1048
        %v1081 = vpack.c.b16 %v1051, %v1050
        %v1082 = vpack.c.b16 %v1053, %v1052
        %v1083 = vpack.c.b16 %v1055, %v1054
        %v1084 = vpack.c.b16 %v1057, %v1056
        %v1085 = vpack.c.b16 %v1059, %v1058
        %v1086 = vpack.c.b16 %v1061, %v1060
        %v1087 = vpack.c.b16 %v1063, %v1062
        %v1088 = vpack.c.b16 %v1065, %v1064
        %v1089 = vpack.c.b16 %v1067, %v1066
        %v1090 = vpack.c.b16 %v1069, %v1068
        %v1091 = vpack.c.b16 %v1071, %v1070
        %v1092 = vpack.c.b16 %v1073, %v1072
        %v1093 = vpack.c.b16 %v1075, %v1074
        %v1094 = vpack.c.b16 %v1077, %v1076
        %v1095 = vpack.c.b16 %v1079, %v1078
        %v1128 = vunpack.c.l.b16 %v1000
        %v1129 = vunpack.c.l.b16 %v1001
        %v1130 = vunpack.c.l.b16 %v1002
        %v1131 = vunpack.c.l.b16 %v1003
        %v1132 = vunpack.c.l.b16 %v1004
        %v1133 = vunpack.c.l.b16 %v1005
        %v1134 = vunpack.c.l.b16 %v1006
        %v1135 = vunpack.c.l.b16 %v1007
        %v1136 = vunpack.c.l.b16 %v1008
        %v1137 = vunpack.c.l.b16 %v1009
        %v1138 = vunpack.c.l.b16 %v1010
        %v1139 = vunpack.c.l.b16 %v1011
        %v1140 = vunpack.c.l.b16 %v1012
        %v1141 = vunpack.c.l.b16 %v1013
        %v1142 = vunpack.c.l.b16 %v1014
        %v1143 = vunpack.c.l.b16 %v1015
        %v1144 = vpack.c.b16 %v1129, %v1128
        %v1145 = vpack.c.b16 %v1131, %v1130
        %v1146 = vpack.c.b16 %v1133, %v1132
        %v1147 = vpack.c.b16 %v1135, %v1134
        %v1148 = vpack.c.b16 %v1137, %v1136
        %v1149 = vpack.c.b16 %v1139, %v1138
        %v1150 = vpack.c.b16 %v1141, %v1140
        %v1151 = vpack.c.b16 %v1143, %v1142
        %1160 = vmatprep.subr.bf16.mxu0 0
        %1161 = vmatpush1.bf16.msra.mxu0 %v1144
        %1162 = vmatprep.subr.bf16.mxu0 0
        %1163 = vmatpush1.bf16.msra.mxu0 %v1145
        %1164 = vmatprep.subr.bf16.mxu0 0
        %1165 = vmatpush1.bf16.msra.mxu0 %v1146
        %1166 = vmatprep.subr.bf16.mxu0 0
        %1167 = vmatpush1.bf16.msra.mxu0 %v1147
        %1168 = vmatprep.subr.bf16.mxu0 0
        %1169 = vmatpush1.bf16.msra.mxu0 %v1148
        %1170 = vmatprep.subr.bf16.mxu0 0
        %1171 = vmatpush1.bf16.msra.mxu0 %v1149
        %1172 = vmatprep.subr.bf16.mxu0 0
        %1173 = vmatpush1.bf16.msra.mxu0 %v1150
        %1174 = vmatprep.subr.bf16.mxu0 0
        %1175 = vmatpush1.bf16.msra.mxu0 %v1151
        %1176 = vmatprep.subr.bf16.mxu0 0
        %1177 = vmatpush1.bf16.msra.mxu0 0
        %1178 = vmatprep.subr.bf16.mxu0 0
        %1179 = vmatpush1.bf16.msra.mxu0 0
        %1180 = vmatprep.subr.bf16.mxu0 0
        %1181 = vmatpush1.bf16.msra.mxu0 0
        %1182 = vmatprep.subr.bf16.mxu0 0
        %1183 = vmatpush1.bf16.msra.mxu0 0
        %1184 = vmatprep.subr.bf16.mxu0 0
        %1185 = vmatpush1.bf16.msra.mxu0 0
        %1186 = vmatprep.subr.bf16.mxu0 0
        %1187 = vmatpush1.bf16.msra.mxu0 0
        %1188 = vmatprep.subr.bf16.mxu0 0
        %1189 = vmatpush1.bf16.msra.mxu0 0
        %1190 = vmatprep.subr.bf16.mxu0 0
        %1191 = vmatpush1.bf16.msra.mxu0 0
        %1192 = vmatprep.mubr.bf16.mxu0 0
        %1193 = vmatmul.mubr.bf16.gmra.mrb[0].mxu0 %v1080
        %v1194 = vpop.f32.mrb[0].mxu0
        %v1195 = vadd.f32 0.0, %v1194
        %v1196 = vpop.f32.mrb[0].mxu0
        %v1197 = vpop.f32.mrb[0].mxu0
        %v1198 = vadd.f32 0.0, %v1197
        %v1199 = vpop.f32.mrb[0].mxu0
        %1200 = vmatprep.mubr.bf16.mxu0 0
        %1201 = vmatmul.mubr.bf16.gmra.mrb[0].mxu0 %v1081
        %v1202 = vpop.f32.mrb[0].mxu0
        %v1203 = vadd.f32 0.0, %v1202
        %v1204 = vpop.f32.mrb[0].mxu0
        %v1205 = vpop.f32.mrb[0].mxu0
        %v1206 = vadd.f32 0.0, %v1205
        %v1207 = vpop.f32.mrb[0].mxu0
        %1208 = vmatprep.mubr.bf16.mxu0 0
        %1209 = vmatmul.mubr.bf16.gmra.mrb[0].mxu0 %v1082
        %v1210 = vpop.f32.mrb[0].mxu0
        %v1211 = vadd.f32 0.0, %v1210
        %v1212 = vpop.f32.mrb[0].mxu0
        %v1213 = vpop.f32.mrb[0].mxu0
        %v1214 = vadd.f32 0.0, %v1213
        %v1215 = vpop.f32.mrb[0].mxu0
        %1216 = vmatprep.mubr.bf16.mxu0 0
        %1217 = vmatmul.mubr.bf16.gmra.mrb[0].mxu0 %v1083
        %v1218 = vpop.f32.mrb[0].mxu0
        %v1219 = vadd.f32 0.0, %v1218
        %v1220 = vpop.f32.mrb[0].mxu0
        %v1221 = vpop.f32.mrb[0].mxu0
        %v1222 = vadd.f32 0.0, %v1221
        %v1223 = vpop.f32.mrb[0].mxu0
        %1224 = vmatprep.mubr.bf16.mxu0 0
        %1225 = vmatmul.mubr.bf16.gmra.mrb[0].mxu0 %v1084
        %v1226 = vpop.f32.mrb[0].mxu0
        %v1227 = vadd.f32 0.0, %v1226
        %v1228 = vpop.f32.mrb[0].mxu0
        %v1229 = vpop.f32.mrb[0].mxu0
        %v1230 = vadd.f32 0.0, %v1229
        %v1231 = vpop.f32.mrb[0].mxu0
        %1232 = vmatprep.mubr.bf16.mxu0 0
        %1233 = vmatmul.mubr.bf16.gmra.mrb[0].mxu0 %v1085
        %v1234 = vpop.f32.mrb[0].mxu0
        %v1235 = vadd.f32 0.0, %v1234
        %v1236 = vpop.f32.mrb[0].mxu0
        %v1237 = vpop.f32.mrb[0].mxu0
        %v1238 = vadd.f32 0.0, %v1237
        %v1239 = vpop.f32.mrb[0].mxu0
        %1240 = vmatprep.mubr.bf16.mxu0 0
        %1241 = vmatmul.mubr.bf16.gmra.mrb[0].mxu0 %v1086
        %v1242 = vpop.f32.mrb[0].mxu0
        %v1243 = vadd.f32 0.0, %v1242
        %v1244 = vpop.f32.mrb[0].mxu0
        %v1245 = vpop.f32.mrb[0].mxu0
        %v1246 = vadd.f32 0.0, %v1245
        %v1247 = vpop.f32.mrb[0].mxu0
        %1248 = vmatprep.mubr.bf16.mxu0 0
        %1249 = vmatmul.mubr.bf16.gmra.mrb[0].mxu0 %v1087
        %v1250 = vpop.f32.mrb[0].mxu0
        %v1251 = vadd.f32 0.0, %v1250
        %v1252 = vpop.f32.mrb[0].mxu0
        %v1253 = vpop.f32.mrb[0].mxu0
        %v1254 = vadd.f32 0.0, %v1253
        %v1255 = vpop.f32.mrb[0].mxu0
        %1256 = vmatprep.mubr.bf16.mxu0 0
        %1257 = vmatmul.mubr.bf16.gmra.mrb[0].mxu0 %v1088
        %v1258 = vpop.f32.mrb[0].mxu0
        %v1259 = vadd.f32 0.0, %v1258
        %v1260 = vpop.f32.mrb[0].mxu0
        %v1261 = vpop.f32.mrb[0].mxu0
        %v1262 = vadd.f32 0.0, %v1261
        %v1263 = vpop.f32.mrb[0].mxu0
        %1264 = vmatprep.mubr.bf16.mxu0 0
        %1265 = vmatmul.mubr.bf16.gmra.mrb[0].mxu0 %v1089
        %v1266 = vpop.f32.mrb[0].mxu0
        %v1267 = vadd.f32 0.0, %v1266
        %v1268 = vpop.f32.mrb[0].mxu0
        %v1269 = vpop.f32.mrb[0].mxu0
        %v1270 = vadd.f32 0.0, %v1269
        %v1271 = vpop.f32.mrb[0].mxu0
        %1272 = vmatprep.mubr.bf16.mxu0 0
        %1273 = vmatmul.mubr.bf16.gmra.mrb[0].mxu0 %v1090
        %v1274 = vpop.f32.mrb[0].mxu0
        %v1275 = vadd.f32 0.0, %v1274
        %v1276 = vpop.f32.mrb[0].mxu0
        %v1277 = vpop.f32.mrb[0].mxu0
        %v1278 = vadd.f32 0.0, %v1277
        %v1279 = vpop.f32.mrb[0].mxu0
        %1280 = vmatprep.mubr.bf16.mxu0 0
        %1281 = vmatmul.mubr.bf16.gmra.mrb[0].mxu0 %v1091
        %v1282 = vpop.f32.mrb[0].mxu0
        %v1283 = vadd.f32 0.0, %v1282
        %v1284 = vpop.f32.mrb[0].mxu0
        %v1285 = vpop.f32.mrb[0].mxu0
        %v1286 = vadd.f32 0.0, %v1285
        %v1287 = vpop.f32.mrb[0].mxu0
        %1288 = vmatprep.mubr.bf16.mxu0 0
        %1289 = vmatmul.mubr.bf16.gmra.mrb[0].mxu0 %v1092
        %v1290 = vpop.f32.mrb[0].mxu0
        %v1291 = vadd.f32 0.0, %v1290
        %v1292 = vpop.f32.mrb[0].mxu0
        %v1293 = vpop.f32.mrb[0].mxu0
        %v1294 = vadd.f32 0.0, %v1293
        %v1295 = vpop.f32.mrb[0].mxu0
        %1296 = vmatprep.mubr.bf16.mxu0 0
        %1297 = vmatmul.mubr.bf16.gmra.mrb[0].mxu0 %v1093
        %v1298 = vpop.f32.mrb[0].mxu0
        %v1299 = vadd.f32 0.0, %v1298
        %v1300 = vpop.f32.mrb[0].mxu0
        %v1301 = vpop.f32.mrb[0].mxu0
        %v1302 = vadd.f32 0.0, %v1301
        %v1303 = vpop.f32.mrb[0].mxu0
        %1304 = vmatprep.mubr.bf16.mxu0 0
        %1305 = vmatmul.mubr.bf16.gmra.mrb[0].mxu0 %v1094
        %v1306 = vpop.f32.mrb[0].mxu0
        %v1307 = vadd.f32 0.0, %v1306
        %v1308 = vpop.f32.mrb[0].mxu0
        %v1309 = vpop.f32.mrb[0].mxu0
        %v1310 = vadd.f32 0.0, %v1309
        %v1311 = vpop.f32.mrb[0].mxu0
        %1312 = vmatprep.mubr.bf16.mxu0 0
        %1313 = vmatmul.mubr.bf16.gmra.mrb[0].mxu0 %v1095
        %v1314 = vpop.f32.mrb[0].mxu0
        %v1315 = vadd.f32 0.0, %v1314
        %v1316 = vpop.f32.mrb[0].mxu0
        %v1317 = vpop.f32.mrb[0].mxu0
        %v1318 = vadd.f32 0.0, %v1317
        %v1319 = vpop.f32.mrb[0].mxu0
        %1320 = vdwg.mxu0
        %v1321 = vadd.f32 %v840, %v1195
        %v1322 = vadd.f32 %v843, %v1198
        %v1323 = vadd.f32 %v848, %v1203
        %v1324 = vadd.f32 %v851, %v1206
        %v1325 = vadd.f32 %v856, %v1211
        %v1326 = vadd.f32 %v859, %v1214
        %v1327 = vadd.f32 %v864, %v1219
        %v1328 = vadd.f32 %v867, %v1222
        %v1329 = vadd.f32 %v872, %v1227
        %v1330 = vadd.f32 %v875, %v1230
        %v1331 = vadd.f32 %v880, %v1235
        %v1332 = vadd.f32 %v883, %v1238
        %v1333 = vadd.f32 %v888, %v1243
        %v1334 = vadd.f32 %v891, %v1246
        %v1335 = vadd.f32 %v896, %v1251
        %v1336 = vadd.f32 %v899, %v1254
        %v1337 = vadd.f32 %v904, %v1259
        %v1338 = vadd.f32 %v907, %v1262
        %v1339 = vadd.f32 %v912, %v1267
        %v1340 = vadd.f32 %v915, %v1270
        %v1341 = vadd.f32 %v920, %v1275
        %v1342 = vadd.f32 %v923, %v1278
        %v1343 = vadd.f32 %v928, %v1283
        %v1344 = vadd.f32 %v931, %v1286
        %v1345 = vadd.f32 %v936, %v1291
        %v1346 = vadd.f32 %v939, %v1294
        %v1347 = vadd.f32 %v944, %v1299
        %v1348 = vadd.f32 %v947, %v1302
        %v1349 = vadd.f32 %v952, %v1307
        %v1350 = vadd.f32 %v955, %v1310
        %v1351 = vadd.f32 %v960, %v1315
        %v1352 = vadd.f32 %v963, %v1318
        %v1353 = vld [vmem:[#allocation7] sm:$0x1]
        %v1355 = vlaneseq
        %v1356 = vshrl.u32 %v1355, 7
        %v1357 = vsub.s32 0, %v1356
        %v1358 = vrot.slane %v1353, %v1357
        %v1360 = vadd.f32 %v1321, %v1358
        %v1361 = vadd.f32 %v1322, %v1358
        %v1362 = vadd.f32 %v1323, %v1358
        %v1363 = vadd.f32 %v1324, %v1358
        %v1364 = vadd.f32 %v1325, %v1358
        %v1365 = vadd.f32 %v1326, %v1358
        %v1366 = vadd.f32 %v1327, %v1358
        %v1367 = vadd.f32 %v1328, %v1358
        %v1368 = vadd.f32 %v1329, %v1358
        %v1369 = vadd.f32 %v1330, %v1358
        %v1370 = vadd.f32 %v1331, %v1358
        %v1371 = vadd.f32 %v1332, %v1358
        %v1372 = vadd.f32 %v1333, %v1358
        %v1373 = vadd.f32 %v1334, %v1358
        %v1374 = vadd.f32 %v1335, %v1358
        %v1375 = vadd.f32 %v1336, %v1358
        %v1376 = vadd.f32 %v1337, %v1358
        %v1377 = vadd.f32 %v1338, %v1358
        %v1378 = vadd.f32 %v1339, %v1358
        %v1379 = vadd.f32 %v1340, %v1358
        %v1380 = vadd.f32 %v1341, %v1358
        %v1381 = vadd.f32 %v1342, %v1358
        %v1382 = vadd.f32 %v1343, %v1358
        %v1383 = vadd.f32 %v1344, %v1358
        %v1384 = vadd.f32 %v1345, %v1358
        %v1385 = vadd.f32 %v1346, %v1358
        %v1386 = vadd.f32 %v1347, %v1358
        %v1387 = vadd.f32 %v1348, %v1358
        %v1388 = vadd.f32 %v1349, %v1358
        %v1389 = vadd.f32 %v1350, %v1358
        %v1390 = vadd.f32 %v1351, %v1358
        %v1391 = vadd.f32 %v1352, %v1358
        %v1392 = vmax.f32 %v1360, 0.0
        %v1393 = vmax.f32 %v1361, 0.0
        %v1394 = vmax.f32 %v1362, 0.0
        %v1395 = vmax.f32 %v1363, 0.0
        %v1396 = vmax.f32 %v1364, 0.0
        %v1397 = vmax.f32 %v1365, 0.0
        %v1398 = vmax.f32 %v1366, 0.0
        %v1399 = vmax.f32 %v1367, 0.0
        %v1400 = vmax.f32 %v1368, 0.0
        %v1401 = vmax.f32 %v1369, 0.0
        %v1402 = vmax.f32 %v1370, 0.0
        %v1403 = vmax.f32 %v1371, 0.0
        %v1404 = vmax.f32 %v1372, 0.0
        %v1405 = vmax.f32 %v1373, 0.0
        %v1406 = vmax.f32 %v1374, 0.0
        %v1407 = vmax.f32 %v1375, 0.0
        %v1408 = vmax.f32 %v1376, 0.0
        %v1409 = vmax.f32 %v1377, 0.0
        %v1410 = vmax.f32 %v1378, 0.0
        %v1411 = vmax.f32 %v1379, 0.0
        %v1412 = vmax.f32 %v1380, 0.0
        %v1413 = vmax.f32 %v1381, 0.0
        %v1414 = vmax.f32 %v1382, 0.0
        %v1415 = vmax.f32 %v1383, 0.0
        %v1416 = vmax.f32 %v1384, 0.0
        %v1417 = vmax.f32 %v1385, 0.0
        %v1418 = vmax.f32 %v1386, 0.0
        %v1419 = vmax.f32 %v1387, 0.0
        %v1420 = vmax.f32 %v1388, 0.0
        %v1421 = vmax.f32 %v1389, 0.0
        %v1422 = vmax.f32 %v1390, 0.0
        %v1423 = vmax.f32 %v1391, 0.0
        %1424 = vst [vmem:[%s256] sm:$0xff] %v1392
        %1425 = vst [vmem:[%s256 + $0x8] sm:$0xff] %v1393
        %1426 = vst [vmem:[%s256 + $0x10] sm:$0xff] %v1394
        %1427 = vst [vmem:[%s256 + $0x18] sm:$0xff] %v1395
        %1428 = vst [vmem:[%s256 + $0x20] sm:$0xff] %v1396
        %1429 = vst [vmem:[%s256 + $0x28] sm:$0xff] %v1397
        %1430 = vst [vmem:[%s256 + $0x30] sm:$0xff] %v1398
        %1431 = vst [vmem:[%s256 + $0x38] sm:$0xff] %v1399
        %1432 = vst [vmem:[%s256 + $0x40] sm:$0xff] %v1400
        %1433 = vst [vmem:[%s256 + $0x48] sm:$0xff] %v1401
        %1434 = vst [vmem:[%s256 + $0x50] sm:$0xff] %v1402
        %1435 = vst [vmem:[%s256 + $0x58] sm:$0xff] %v1403
        %1436 = vst [vmem:[%s256 + $0x60] sm:$0xff] %v1404
        %1437 = vst [vmem:[%s256 + $0x68] sm:$0xff] %v1405
        %1438 = vst [vmem:[%s256 + $0x70] sm:$0xff] %v1406
        %1439 = vst [vmem:[%s256 + $0x78] sm:$0xff] %v1407
        %1440 = vst [vmem:[%s256 + $0x80] sm:$0xff] %v1408
        %1441 = vst [vmem:[%s256 + $0x88] sm:$0xff] %v1409
        %1442 = vst [vmem:[%s256 + $0x90] sm:$0xff] %v1410
        %1443 = vst [vmem:[%s256 + $0x98] sm:$0xff] %v1411
        %1444 = vst [vmem:[%s256 + $0xa0] sm:$0xff] %v1412
        %1445 = vst [vmem:[%s256 + $0xa8] sm:$0xff] %v1413
        %1446 = vst [vmem:[%s256 + $0xb0] sm:$0xff] %v1414
        %1447 = vst [vmem:[%s256 + $0xb8] sm:$0xff] %v1415
        %1448 = vst [vmem:[%s256 + $0xc0] sm:$0xff] %v1416
        %1449 = vst [vmem:[%s256 + $0xc8] sm:$0xff] %v1417
        %1450 = vst [vmem:[%s256 + $0xd0] sm:$0xff] %v1418
        %1451 = vst [vmem:[%s256 + $0xd8] sm:$0xff] %v1419
        %1452 = vst [vmem:[%s256 + $0xe0] sm:$0xff] %v1420
        %1453 = vst [vmem:[%s256 + $0xe8] sm:$0xff] %v1421
        %1454 = vst [vmem:[%s256 + $0xf0] sm:$0xff] %v1422
        %1455 = vst [vmem:[%s256 + $0xf8] sm:$0xff] %v1423
        %s1456 = sand.u32 %s132, 1
        %s1457 = scalar_lea.sflag [#allocation4], %s1456
        %s1458 = sand.u32 %s132, 1
        %s1459 = smul.addr %s1458, 256
        %s1460 = scalar_lea.vmem [#allocation8], %s1459
        // Predicated region
        $region45: #{tpu_custom_call.1} parent=31 // pred_check
          %p1461 = pneg %p142
        $region46: #{tpu_custom_call.1} parent=31 // pred_check_branch
          %1463 = sbr.rel (%p1461) target = $region48
        $region47: #{tpu_custom_call.1} parent=31 // pred_region
          %s1465 = ssub.s32 4096, 4096
          %1466 = vsyncadd %s1457, %s1465
          %s1467 = smul.addr %s27, 32
          %s1468 = sadd.s32 %s28, %s1467
          %s1469 = smul.addr %s26, 32
          %s1470 = sadd.s32 %s1468, %s1469
          %s1471 = smul.addr %s1470, 128
          %s1472 = scalar_lea.hbm %s3, %s1471
          %s1473 = sshll.u32 %s1460, 4
          %s1474 = int_to_ptr.vmem [resolvable:$true] %s1473
          %1479 = dma.vmem_to_hbm [thread:$0]  %s1474, 4096, %s1472, %s1457, 128, 128, 8
        $region48: #{tpu_custom_call.1} parent=31 // pred_fallthru
          _
      $region32: #{tpu_custom_call.1} parent=5 // pred_fallthru
        _
      %p1480 = scmp.le.s32.totalorder 2, %s16
      // Predicated region
      $region49: #{tpu_custom_call.1} parent=5 // pred_check
        %p1481 = pneg %p1480
      $region50: #{tpu_custom_call.1} parent=5 // pred_check_branch
        %1483 = sbr.rel (%p1481) target = $region52
      $region51: #{tpu_custom_call.1} parent=5 // pred_region
        %s1484 = ssub.s32 %s16, 2
        // Predicated region
        $region53: #{tpu_custom_call.1} parent=51 // pred_check
          %p1485 = pneg %p148
        $region54: #{tpu_custom_call.1} parent=51 // pred_check_branch
          %1487 = sbr.rel (%p1485) target = $region56
        $region55: #{tpu_custom_call.1} parent=51 // pred_region
          %s1488 = sand.u32 %s133, 1
          %s1489 = scalar_lea.sflag [#allocation4], %s1488
          %s1490 = sand.u32 %s133, 1
          %s1491 = smul.addr %s1490, 256
          %s1492 = scalar_lea.vmem [#allocation8], %s1491
          %1493 = dma.done %s1489, 4096
        $region56: #{tpu_custom_call.1} parent=51 // pred_fallthru
          _
      $region52: #{tpu_custom_call.1} parent=5 // pred_fallthru
        _
    $region6: #{tpu_custom_call.1} parent=1 // loop_footer
      %s20 = sadd.s32 1, %s16
    $region7: #{tpu_custom_call.1} parent=1 // loop_footer_branch
      %15 = sbr.rel target = $region3
    $region8: #{tpu_custom_call.1} parent=1 // loop_exit
      _
    %1494 = vsyncpa [#allocation3], 1
    %s1495 = scalar_lea.sflag [#allocation3], 1
    %1496 = vsyncpa %s1495, 1
    %1497 = vsyncpa [#allocation6], 1
    %1498 = vsyncpa [#allocation4], 1
    %s1499 = scalar_lea.sflag [#allocation4], 1
    %1500 = vsyncpa %s1499, 1

</llo_original>
